<compile_context>
chip_gen: v7x
topology: tpu7x:2x2x1
jax: 0.10.0
libtpu: 0.0.40
codegen_flags: <defaults>
</compile_context>

<pallas_src>
import functools

import jax
import jax.numpy as jnp
from jax.experimental import pallas as pl
from jax.experimental.pallas import tpu as pltpu

TILE = 512                      # max tile; small graphs use a single full-extent tile
MIN_PAD = 32                    # int8 sublane minimum (also covers bf16's 16)
VMEM_LIMIT = 32 * 1024 * 1024   # explicit, safe on v5e/v6e/v7x; footprint stays well below


def _round_up(x, m):
    return ((x + m - 1) // m) * m


def _pad2(a, rows, cols):
    return jnp.pad(a, ((0, rows - a.shape[0]), (0, cols - a.shape[1])))


def _pick_pad_and_tile(n, tile=TILE, min_mult=MIN_PAD):
    """Pad N to the hardware minimum for small graphs (single full-extent tile),
    or to a TILE multiple for large graphs."""
    if n <= tile:
        n_pad = _round_up(n, min_mult)
        return n_pad, n_pad
    return _round_up(n, tile), tile


# ----------------------------------------------------------------------------
# Pallas kernels
# ----------------------------------------------------------------------------
def _gin_layer_kernel(apply_relu, tm, tk):
    """out = MLP(A @ H + (1+eps)*H); A streamed as int8 K-tiles, H resident in VMEM,
    f32 accumulator, fused 2-layer MLP epilogue."""
    def kernel(eps_ref, adj_ref, h_ref, w1_ref, b1_ref, w2_ref, b2_ref,
               out_ref, acc_ref):
        i = pl.program_id(0)
        k = pl.program_id(1)

        @pl.when(k == 0)
        def _():
            acc_ref[...] = jnp.zeros_like(acc_ref)

        # int8 adjacency tile -> bf16 in-register (cast hides under DMA / vmatmul),
        # bf16 x bf16 -> f32 on the MXU; H K-chunk sliced from the resident buffer.
        koff = pl.multiple_of(k * tk, tk)
        a_bf = adj_ref[...].astype(jnp.bfloat16)
        acc_ref[...] += jnp.dot(a_bf, h_ref[pl.ds(koff, tk), :],
                                preferred_element_type=jnp.float32)

        @pl.when(k == pl.num_programs(1) - 1)
        def _():
            # Self term from the resident bf16 H row tile, scaled by (1 + eps) (SMEM).
            roff = pl.multiple_of(i * tm, tm)
            h_self = h_ref[pl.ds(roff, tm), :].astype(jnp.float32)
            agg = acc_ref[...] + (1.0 + eps_ref[0]) * h_self
            z = jnp.dot(agg.astype(jnp.bfloat16), w1_ref[...],
                        preferred_element_type=jnp.float32) + b1_ref[...]
            z = jnp.maximum(z, 0.0)
            out = jnp.dot(z.astype(jnp.bfloat16), w2_ref[...],
                          preferred_element_type=jnp.float32) + b2_ref[...]
            if apply_relu:
                out = jnp.maximum(out, 0.0)
            out_ref[...] = out
    return kernel


def gin_layer(adj_i8, h_pad, w1, b1, w2, b2, eps, apply_relu, tm, tk):
    """One GIN layer on padded inputs.

    adj_i8: (n_pad, n_pad) int8 0/1 adjacency (A[i, j] = 1 iff edge j -> i).
    h_pad:  (n_pad, din_pad) f32; padded feature columns / rows beyond valid data are
            either zero or masked downstream.
    Returns (n_pad, hid_pad) f32 with padded feature columns exactly zero.
    """
    n_pad = adj_i8.shape[0]
    din_pad = h_pad.shape[1]
    hid = w2.shape[1]
    hid_pad = _round_up(hid, 128)

    h_bf = h_pad.astype(jnp.bfloat16)                     # MXU operand, held resident
    w1p = _pad2(w1, din_pad, hid_pad).astype(jnp.bfloat16)
    b1p = _pad2(b1, 1, hid_pad)                           # f32
    w2p = _pad2(w2, hid_pad, hid_pad).astype(jnp.bfloat16)
    b2p = _pad2(b2, 1, hid_pad)                           # f32
    eps1 = eps.reshape((1,)).astype(jnp.float32)          # tiny SMEM scalar

    grid = (n_pad // tm, n_pad // tk)
    return pl.pallas_call(
        _gin_layer_kernel(apply_relu, tm, tk),
        out_shape=jax.ShapeDtypeStruct((n_pad, hid_pad), jnp.float32),
        grid_spec=pltpu.PrefetchScalarGridSpec(
            num_scalar_prefetch=0,
            grid=grid,
            in_specs=[
                pl.BlockSpec(memory_space=pltpu.MemorySpace.SMEM),      # eps scalar
                pl.BlockSpec((tm, tk), lambda i, k: (i, k)),            # adjacency int8
                pl.BlockSpec((n_pad, din_pad), lambda i, k: (0, 0)),    # resident bf16 H
                pl.BlockSpec((din_pad, hid_pad), lambda i, k: (0, 0)),  # w1
                pl.BlockSpec((1, hid_pad), lambda i, k: (0, 0)),        # b1
                pl.BlockSpec((hid_pad, hid_pad), lambda i, k: (0, 0)),  # w2
                pl.BlockSpec((1, hid_pad), lambda i, k: (0, 0)),        # b2
            ],
            out_specs=pl.BlockSpec((tm, hid_pad), lambda i, k: (i, 0)),
            scratch_shapes=[pltpu.VMEM((tm, din_pad), jnp.float32)],
        ),
        compiler_params=pltpu.CompilerParams(
            dimension_semantics=("parallel", "arbitrary"),
            vmem_limit_bytes=VMEM_LIMIT,
        ),
    )(eps1, adj_i8, h_bf, w1p, b1p, w2p, b2p)


def _sim_kernel(hr_ref, hc_ref, br_ref, bc_ref, out_ref):
    """Tiled gram matrix of pre-normalized rows + fused same-graph / padding mask."""
    s = jax.lax.dot_general(hr_ref[...], hc_ref[...],
                            dimension_numbers=(((1,), (1,)), ((), ())),
                            preferred_element_type=jnp.float32)
    br = br_ref[...]                                       # (TM, 1)
    bc = bc_ref[...]                                       # (1, TN)
    valid = (br == bc) & (br >= 0) & (bc >= 0)             # padded rows/cols -> -inf
    out_ref[...] = jnp.where(valid, s, -jnp.inf)


def compute_sim(h_pad, b_pad, tm, tn):
    """Cosine-similarity matrix on already-padded features; padded entries are -inf so
    the result can feed top_k directly (no [:n,:n] glue copy)."""
    n_pad, d_pad = h_pad.shape
    # Row normalization hoisted out of the N^2-scaled kernel (one rsqrt per row).
    inv_norm = jax.lax.rsqrt(jnp.sum(h_pad * h_pad, axis=-1, keepdims=True) + 1e-12)
    hn = (h_pad * inv_norm).astype(jnp.bfloat16)

    b_row = b_pad.reshape(n_pad, 1)
    b_col = b_pad.reshape(1, n_pad)

    grid = (n_pad // tm, n_pad // tn)
    # TODO(synk): emitting the sim matrix as bf16 would halve the dominant output byte
    #             stream but may reorder near-tie top_k picks vs the f32 reference.
    return pl.pallas_call(
        _sim_kernel,
        out_shape=jax.ShapeDtypeStruct((n_pad, n_pad), jnp.float32),
        grid_spec=pltpu.PrefetchScalarGridSpec(
            num_scalar_prefetch=0,
            grid=grid,
            in_specs=[
                pl.BlockSpec((tm, d_pad), lambda i, j: (i, 0)),
                pl.BlockSpec((tn, d_pad), lambda i, j: (j, 0)),
                pl.BlockSpec((tm, 1), lambda i, j: (i, 0)),
                pl.BlockSpec((1, tn), lambda i, j: (0, j)),
            ],
            out_specs=pl.BlockSpec((tm, tn), lambda i, j: (i, j)),
        ),
        compiler_params=pltpu.CompilerParams(
            dimension_semantics=("parallel", "parallel"),
            vmem_limit_bytes=VMEM_LIMIT,
        ),
    )(hn, hn, b_row, b_col)


# ----------------------------------------------------------------------------
# Parameter init (deterministic, synthetic — GINEncoder shapes)
# ----------------------------------------------------------------------------
def init_encoder_params(key, in_dim, hidden_dim, num_layers):
    params = []
    d_ins = [in_dim] + [hidden_dim] * (num_layers - 1)
    for layer in range(num_layers):
        key, k1, k2 = jax.random.split(key, 3)
        d_in = d_ins[layer]
        w1 = jax.random.normal(k1, (d_in, hidden_dim), jnp.float32) / jnp.sqrt(float(d_in))
        b1 = jnp.zeros((1, hidden_dim), jnp.float32)
        w2 = jax.random.normal(k2, (hidden_dim, hidden_dim), jnp.float32) / jnp.sqrt(float(hidden_dim))
        b2 = jnp.zeros((1, hidden_dim), jnp.float32)
        eps = jnp.zeros((1,), jnp.float32)  # GIN epsilon, init 0
        params.append((w1, b1, w2, b2, eps))
    return params


# ----------------------------------------------------------------------------
# HONAugmentor forward
# ----------------------------------------------------------------------------
@functools.partial(jax.jit, static_argnames=("keep_edges", "edge_mul"))
def hon_augmentor_forward(params, x, edge_index, edge_attr=None, batch=None,
                          keep_edges=True, edge_mul=2):
    n, in_dim = x.shape
    n_pad, tile = _pick_pad_and_tile(n)

    # Dense adjacency for message passing built DIRECTLY in int8 at padded size
    # (no f32 scatter + cast pass). A[i, j] = 1 iff edge j -> i.
    adj_i8 = (jnp.zeros((n_pad, n_pad), jnp.int8)
              .at[edge_index[1], edge_index[0]].set(jnp.int8(1)))

    # ---- GIN encoder (tiled Pallas kernels) ----
    h = _pad2(x, n_pad, _round_up(in_dim, 128))           # f32, zero-padded
    num_layers = len(params)
    for layer, (w1, b1, w2, b2, eps) in enumerate(params):
        h = gin_layer(adj_i8, h, w1, b1, w2, b2, eps,
                      apply_relu=(layer < num_layers - 1), tm=tile, tk=tile)
    # h: (n_pad, hid_pad) f32; padded feature columns are exactly zero, padded rows are
    # masked downstream via batch id -1 (no N^2 slice copy needed).

    # Batch ids (zeros if None) with -1 for padded rows.
    bvec = jnp.zeros((n,), jnp.int32) if batch is None else batch.astype(jnp.int32)
    b_pad = jnp.full((n_pad,), -1, jnp.int32).at[:n].set(bvec)

    # ---- no_grad block of the reference forward ----
    k = edge_mul * edge_index.shape[1]
    adj = compute_sim(h, b_pad, tile, tile)               # (n_pad, n_pad), pads = -inf
    if keep_edges:
        adj = adj.at[edge_index[0], edge_index[1]].add(jnp.max(adj))

    # topk_edges(adj, k): data-dependent selection on the padded flat matrix
    # (padded entries are -inf so they are never selected ahead of valid pairs).
    flat = adj.reshape(-1)
    vals, idx = jax.lax.top_k(flat, k)
    row = idx // n_pad
    col = idx % n_pad
    edge_index_ = jnp.stack([row, col], axis=0)

    # softmax(edge_weight, edge_index_[0]): segment softmax over source nodes (plain JAX)
    seg_max = jax.ops.segment_max(vals, row, num_segments=n)
    e = jnp.exp(vals - seg_max[row])
    seg_sum = jax.ops.segment_sum(e, row, num_segments=n)
    edge_weight = e / seg_sum[row]

    # `self.linear` is never created in __init__ (hasattr guard) -> x passes through unchanged.
    return {'x': x, 'edge_index': edge_index_, 'edge_attr': edge_weight, 'batch': batch}


# ----------------------------------------------------------------------------
if __name__ == "__main__":
    N, IN_DIM, EDGE_DIM = 16, 8, 4
    HIDDEN, NUM_LAYERS = 32, 2           # conf.aug_dim, conf.num_gnn_layers
    E, EDGE_MUL, KEEP_EDGES = 24, 2, True

    key = jax.random.PRNGKey(0)
    kx, ke, ka, kp = jax.random.split(key, 4)
    x = jax.random.normal(kx, (N, IN_DIM), jnp.float32)
    edge_index = jax.random.randint(ke, (2, E), 0, N, dtype=jnp.int32)
    edge_attr = jax.random.normal(ka, (E, EDGE_DIM), jnp.float32)

    params = init_encoder_params(kp, IN_DIM, HIDDEN, NUM_LAYERS)

    out = hon_augmentor_forward(params, x, edge_index, edge_attr=edge_attr,
                                batch=None, keep_edges=KEEP_EDGES, edge_mul=EDGE_MUL)
    jax.block_until_ready(out)

    assert out['x'].shape == (N, IN_DIM)
    assert out['edge_index'].shape == (2, EDGE_MUL * E)
    assert out['edge_attr'].shape == (EDGE_MUL * E,)
    assert bool(jnp.all(out['edge_index'] >= 0)) and bool(jnp.all(out['edge_index'] < N))
    assert bool(jnp.all(jnp.isfinite(out['edge_attr'])))
    print("KERNEL_OK")
</pallas_src>

<mosaic_0001>
module attributes {stable_mosaic.version = 11 : i64} {
  func.func private @main(%arg0: i32) attributes {dimension_semantics = [#tpu.dimension_semantics<core_parallel>], iteration_bounds = array<i64: 2>, tpu.core_type = #tpu.core_type<sc_scalar_subcore>, window_params = []} {
    return
  }
}

module attributes {stable_mosaic.version = 11 : i64} {
  func.func private @main(%arg0: i32) attributes {dimension_semantics = [#tpu.dimension_semantics<core_parallel>], iteration_bounds = array<i64: 2>, tpu.core_type = #tpu.core_type<sc_scalar_subcore>, window_params = []} {
    return
  }
}

module attributes {stable_mosaic.version = 11 : i64} {
  func.func @kernel(%arg0: i32, %arg1: i32, %arg2: memref<1xf32, #tpu.memory_space<smem>>, %arg3: memref<32x32xi8, #tpu.memory_space<vmem>>, %arg4: memref<32x128xbf16, #tpu.memory_space<vmem>>, %arg5: memref<128x128xbf16, #tpu.memory_space<vmem>>, %arg6: memref<1x128xf32, #tpu.memory_space<vmem>>, %arg7: memref<128x128xbf16, #tpu.memory_space<vmem>>, %arg8: memref<1x128xf32, #tpu.memory_space<vmem>>, %arg9: memref<32x128xf32, #tpu.memory_space<vmem>>, %arg10: memref<32x128xf32, #tpu.memory_space<vmem>>) attributes {dimension_semantics = [#tpu.dimension_semantics<parallel>, #tpu.dimension_semantics<arbitrary>], iteration_bounds = array<i64: 1, 1>, scalar_prefetch = 0 : i64, scratch_operands = 1 : i64, tpu.core_type = #tpu.core_type<tc>, window_params = [{transform_indices = @transform_0, window_bounds = array<i64: 1>}, {transform_indices = @transform_1, window_bounds = array<i64: 32, 32>}, {pipeline_mode = #tpu.pipeline_mode<synchronous>, transform_indices = @transform_2, window_bounds = array<i64: 32, 128>}, {pipeline_mode = #tpu.pipeline_mode<synchronous>, transform_indices = @transform_3, window_bounds = array<i64: 128, 128>}, {pipeline_mode = #tpu.pipeline_mode<synchronous>, transform_indices = @transform_4, window_bounds = array<i64: 1, 128>}, {pipeline_mode = #tpu.pipeline_mode<synchronous>, transform_indices = @transform_5, window_bounds = array<i64: 128, 128>}, {pipeline_mode = #tpu.pipeline_mode<synchronous>, transform_indices = @transform_6, window_bounds = array<i64: 1, 128>}, {transform_indices = @transform_7, window_bounds = array<i64: 32, 128>}]} {
    %c0_i32 = arith.constant 0 : i32
    %0 = arith.cmpi eq, %arg1, %c0_i32 : i32
    %1 = arith.extui %0 : i1 to i32
    %c0_i32_0 = arith.constant 0 : i32
    %2 = arith.cmpi ne, %1, %c0_i32_0 : i32
    scf.if %2 {
      %cst_9 = arith.constant 0.000000e+00 : f32
      %16 = vector.broadcast %cst_9 : f32 to vector<32x128xf32>
      %c0_10 = arith.constant 0 : index
      %c0_11 = arith.constant 0 : index
      %17 = vector.load %arg10[%c0_10, %c0_11] : memref<32x128xf32, #tpu.memory_space<vmem>>, vector<32x128xf32>
      tpu.vector_store %arg10[%c0_10, %c0_11], %16 {strides = array<i32>} : memref<32x128xf32, #tpu.memory_space<vmem>>, vector<32x128xf32>,
    } else {
    }
    %c32_i32 = arith.constant 32 : i32
    %3 = arith.muli %arg1, %c32_i32 : i32
    %4 = tpu.assume_multiple %3, 32 : i32
    %c0 = arith.constant 0 : index
    %c0_1 = arith.constant 0 : index
    %5 = vector.load %arg3[%c0, %c0_1] : memref<32x32xi8, #tpu.memory_space<vmem>>, vector<32x32xi8>
    %6 = arith.sitofp %5 : vector<32x32xi8> to vector<32x32xbf16>
    %c0_2 = arith.constant 0 : index
    %c0_3 = arith.constant 0 : index
    %7 = vector.load %arg10[%c0_2, %c0_3] : memref<32x128xf32, #tpu.memory_space<vmem>>, vector<32x128xf32>
    %8 = arith.index_cast %4 : i32 to index
    %c0_4 = arith.constant 0 : index
    %9 = vector.load %arg4[%8, %c0_4] : memref<32x128xbf16, #tpu.memory_space<vmem>>, vector<32x128xbf16>
    %cst = arith.constant dense<0.000000e+00> : vector<32x128xf32>
    %10 = tpu.matmul %6, %9, %cst {dimension_numbers = #tpu.dot_dimension_numbers<[1], [0], [0], [1], [0, 0, 1, 1], [], []>} : vector<32x32xbf16>, vector<32x128xbf16>, vector<32x128xf32> -> vector<32x128xf32>
    %11 = arith.addf %7, %10 : vector<32x128xf32>
    %c0_5 = arith.constant 0 : index
    %c0_6 = arith.constant 0 : index
    %12 = vector.load %arg10[%c0_5, %c0_6] : memref<32x128xf32, #tpu.memory_space<vmem>>, vector<32x128xf32>
    tpu.vector_store %arg10[%c0_5, %c0_6], %11 {strides = array<i32>} : memref<32x128xf32, #tpu.memory_space<vmem>>, vector<32x128xf32>,
    %c0_i32_7 = arith.constant 0 : i32
    %13 = arith.cmpi eq, %arg1, %c0_i32_7 : i32
    %14 = arith.extui %13 : i1 to i32
    %c0_i32_8 = arith.constant 0 : i32
    %15 = arith.cmpi ne, %14, %c0_i32_8 : i32
    scf.if %15 {
      %c32_i32_9 = arith.constant 32 : i32
      %16 = arith.muli %arg0, %c32_i32_9 : i32
      %17 = tpu.assume_multiple %16, 32 : i32
      %18 = arith.index_cast %17 : i32 to index
      %c0_10 = arith.constant 0 : index
      %19 = vector.load %arg4[%18, %c0_10] : memref<32x128xbf16, #tpu.memory_space<vmem>>, vector<32x128xbf16>
      %20 = arith.extf %19 : vector<32x128xbf16> to vector<32x128xf32>
      %c0_11 = arith.constant 0 : index
      %c0_12 = arith.constant 0 : index
      %21 = vector.load %arg10[%c0_11, %c0_12] : memref<32x128xf32, #tpu.memory_space<vmem>>, vector<32x128xf32>
      %c0_13 = arith.constant 0 : index
      %22 = memref.load %arg2[%c0_13] : memref<1xf32, #tpu.memory_space<smem>>
      %cst_14 = arith.constant 1.000000e+00 : f32
      %23 = arith.addf %cst_14, %22 : f32
      %24 = vector.broadcast %23 : f32 to vector<32x128xf32>
      %25 = arith.mulf %24, %20 : vector<32x128xf32>
      %26 = arith.addf %21, %25 : vector<32x128xf32>
      %27 = arith.truncf %26 : vector<32x128xf32> to vector<32x128xbf16>
      %c0_15 = arith.constant 0 : index
      %c0_16 = arith.constant 0 : index
      %28 = vector.load %arg5[%c0_15, %c0_16] : memref<128x128xbf16, #tpu.memory_space<vmem>>, vector<128x128xbf16>
      %cst_17 = arith.constant dense<0.000000e+00> : vector<32x128xf32>
      %29 = tpu.matmul %27, %28, %cst_17 {dimension_numbers = #tpu.dot_dimension_numbers<[1], [0], [0], [1], [0, 0, 1, 1], [], []>} : vector<32x128xbf16>, vector<128x128xbf16>, vector<32x128xf32> -> vector<32x128xf32>
      %c0_18 = arith.constant 0 : index
      %c0_19 = arith.constant 0 : index
      %30 = vector.load %arg6[%c0_18, %c0_19] : memref<1x128xf32, #tpu.memory_space<vmem>>, vector<1x128xf32>
      %31 = vector.broadcast %30 : vector<1x128xf32> to vector<32x128xf32>
      %32 = arith.addf %29, %31 : vector<32x128xf32>
      %cst_20 = arith.constant 0.000000e+00 : f32
      %33 = vector.broadcast %cst_20 : f32 to vector<32x128xf32>
      %34 = arith.maximumf %32, %33 : vector<32x128xf32>
      %35 = arith.truncf %34 : vector<32x128xf32> to vector<32x128xbf16>
      %c0_21 = arith.constant 0 : index
      %c0_22 = arith.constant 0 : index
      %36 = vector.load %arg7[%c0_21, %c0_22] : memref<128x128xbf16, #tpu.memory_space<vmem>>, vector<128x128xbf16>
      %cst_23 = arith.constant dense<0.000000e+00> : vector<32x128xf32>
      %37 = tpu.matmul %35, %36, %cst_23 {dimension_numbers = #tpu.dot_dimension_numbers<[1], [0], [0], [1], [0, 0, 1, 1], [], []>} : vector<32x128xbf16>, vector<128x128xbf16>, vector<32x128xf32> -> vector<32x128xf32>
      %c0_24 = arith.constant 0 : index
      %c0_25 = arith.constant 0 : index
      %38 = vector.load %arg8[%c0_24, %c0_25] : memref<1x128xf32, #tpu.memory_space<vmem>>, vector<1x128xf32>
      %39 = vector.broadcast %38 : vector<1x128xf32> to vector<32x128xf32>
      %40 = arith.addf %37, %39 : vector<32x128xf32>
      %c0_26 = arith.constant 0 : index
      %c0_27 = arith.constant 0 : index
      %41 = vector.load %arg9[%c0_26, %c0_27] : memref<32x128xf32, #tpu.memory_space<vmem>>, vector<32x128xf32>
      tpu.vector_store %arg9[%c0_26, %c0_27], %40 {strides = array<i32>} : memref<32x128xf32, #tpu.memory_space<vmem>>, vector<32x128xf32>,
    } else {
    }
    return
  }
  func.func @transform_0(%arg0: i32, %arg1: i32) -> i32 {
    %c0_i32 = arith.constant 0 : i32
    %c0_i32_0 = arith.constant 0 : i32
    return %c0_i32 : i32
  }
  func.func @transform_1(%arg0: i32, %arg1: i32) -> (i32, i32) {
    %c0_i32 = arith.constant 0 : i32
    return %arg0, %arg1 : i32, i32
  }
  func.func @transform_2(%arg0: i32, %arg1: i32) -> (i32, i32) {
    %c0_i32 = arith.constant 0 : i32
    %c0_i32_0 = arith.constant 0 : i32
    %c0_i32_1 = arith.constant 0 : i32
    return %c0_i32, %c0_i32_0 : i32, i32
  }
  func.func @transform_3(%arg0: i32, %arg1: i32) -> (i32, i32) {
    %c0_i32 = arith.constant 0 : i32
    %c0_i32_0 = arith.constant 0 : i32
    %c0_i32_1 = arith.constant 0 : i32
    return %c0_i32, %c0_i32_0 : i32, i32
  }
  func.func @transform_4(%arg0: i32, %arg1: i32) -> (i32, i32) {
    %c0_i32 = arith.constant 0 : i32
    %c0_i32_0 = arith.constant 0 : i32
    %c0_i32_1 = arith.constant 0 : i32
    return %c0_i32, %c0_i32_0 : i32, i32
  }
  func.func @transform_5(%arg0: i32, %arg1: i32) -> (i32, i32) {
    %c0_i32 = arith.constant 0 : i32
    %c0_i32_0 = arith.constant 0 : i32
    %c0_i32_1 = arith.constant 0 : i32
    return %c0_i32, %c0_i32_0 : i32, i32
  }
  func.func @transform_6(%arg0: i32, %arg1: i32) -> (i32, i32) {
    %c0_i32 = arith.constant 0 : i32
    %c0_i32_0 = arith.constant 0 : i32
    %c0_i32_1 = arith.constant 0 : i32
    return %c0_i32, %c0_i32_0 : i32, i32
  }
  func.func @transform_7(%arg0: i32, %arg1: i32) -> (i32, i32) {
    %c0_i32 = arith.constant 0 : i32
    %c0_i32_0 = arith.constant 0 : i32
    return %arg0, %c0_i32 : i32, i32
  }
}

module attributes {stable_mosaic.version = 11 : i64} {
  func.func @_sim_kernel(%arg0: i32, %arg1: i32, %arg2: memref<32x128xbf16, #tpu.memory_space<vmem>>, %arg3: memref<32x128xbf16, #tpu.memory_space<vmem>>, %arg4: memref<32x1xi32, #tpu.memory_space<vmem>>, %arg5: memref<1x32xi32, #tpu.memory_space<vmem>>, %arg6: memref<32x32xf32, #tpu.memory_space<vmem>>) attributes {dimension_semantics = [#tpu.dimension_semantics<parallel>, #tpu.dimension_semantics<parallel>], iteration_bounds = array<i64: 1, 1>, scalar_prefetch = 0 : i64, scratch_operands = 0 : i64, tpu.core_type = #tpu.core_type<tc>, window_params = [{transform_indices = @transform_0, window_bounds = array<i64: 32, 128>}, {transform_indices = @transform_1, window_bounds = array<i64: 32, 128>}, {transform_indices = @transform_2, window_bounds = array<i64: 32, 1>}, {transform_indices = @transform_3, window_bounds = array<i64: 1, 32>}, {transform_indices = @transform_4, window_bounds = array<i64: 32, 32>}]} {
    %c0 = arith.constant 0 : index
    %c0_0 = arith.constant 0 : index
    %0 = vector.load %arg2[%c0, %c0_0] : memref<32x128xbf16, #tpu.memory_space<vmem>>, vector<32x128xbf16>
    %c0_1 = arith.constant 0 : index
    %c0_2 = arith.constant 0 : index
    %1 = vector.load %arg3[%c0_1, %c0_2] : memref<32x128xbf16, #tpu.memory_space<vmem>>, vector<32x128xbf16>
    %cst = arith.constant dense<0.000000e+00> : vector<32x32xf32>
    %2 = tpu.matmul %0, %1, %cst {dimension_numbers = #tpu.dot_dimension_numbers<[1], [1], [0], [0], [0, 0, 1, 0], [], []>} : vector<32x128xbf16>, vector<32x128xbf16>, vector<32x32xf32> -> vector<32x32xf32>
    %c0_3 = arith.constant 0 : index
    %c0_4 = arith.constant 0 : index
    %3 = vector.load %arg4[%c0_3, %c0_4] : memref<32x1xi32, #tpu.memory_space<vmem>>, vector<32x1xi32>
    %c0_5 = arith.constant 0 : index
    %c0_6 = arith.constant 0 : index
    %4 = vector.load %arg5[%c0_5, %c0_6] : memref<1x32xi32, #tpu.memory_space<vmem>>, vector<1x32xi32>
    %5 = vector.broadcast %3 : vector<32x1xi32> to vector<32x32xi32>
    %6 = vector.broadcast %4 : vector<1x32xi32> to vector<32x32xi32>
    %7 = arith.cmpi eq, %5, %6 : vector<32x32xi32>
    %c0_i32 = arith.constant 0 : i32
    %8 = vector.broadcast %c0_i32 : i32 to vector<32x1xi32>
    %9 = arith.cmpi sge, %3, %8 : vector<32x1xi32>
    %10 = vector.broadcast %9 : vector<32x1xi1> to vector<32x32xi1>
    %11 = arith.andi %7, %10 : vector<32x32xi1>
    %c0_i32_7 = arith.constant 0 : i32
    %12 = vector.broadcast %c0_i32_7 : i32 to vector<1x32xi32>
    %13 = arith.cmpi sge, %4, %12 : vector<1x32xi32>
    %14 = vector.broadcast %13 : vector<1x32xi1> to vector<32x32xi1>
    %15 = arith.andi %11, %14 : vector<32x32xi1>
    %cst_8 = arith.constant 0xFF800000 : f32
    %16 = vector.broadcast %cst_8 : f32 to vector<32x32xf32>
    %17 = arith.select %15, %2, %16 : vector<32x32xi1>, vector<32x32xf32>
    %c0_9 = arith.constant 0 : index
    %c0_10 = arith.constant 0 : index
    %18 = vector.load %arg6[%c0_9, %c0_10] : memref<32x32xf32, #tpu.memory_space<vmem>>, vector<32x32xf32>
    tpu.vector_store %arg6[%c0_9, %c0_10], %17 {strides = array<i32>} : memref<32x32xf32, #tpu.memory_space<vmem>>, vector<32x32xf32>,
    return
  }
  func.func @transform_0(%arg0: i32, %arg1: i32) -> (i32, i32) {
    %c0_i32 = arith.constant 0 : i32
    %c0_i32_0 = arith.constant 0 : i32
    return %arg0, %c0_i32 : i32, i32
  }
  func.func @transform_1(%arg0: i32, %arg1: i32) -> (i32, i32) {
    %c0_i32 = arith.constant 0 : i32
    %c0_i32_0 = arith.constant 0 : i32
    return %arg1, %c0_i32 : i32, i32
  }
  func.func @transform_2(%arg0: i32, %arg1: i32) -> (i32, i32) {
    %c0_i32 = arith.constant 0 : i32
    %c0_i32_0 = arith.constant 0 : i32
    return %arg0, %c0_i32 : i32, i32
  }
  func.func @transform_3(%arg0: i32, %arg1: i32) -> (i32, i32) {
    %c0_i32 = arith.constant 0 : i32
    %c0_i32_0 = arith.constant 0 : i32
    return %c0_i32, %arg1 : i32, i32
  }
  func.func @transform_4(%arg0: i32, %arg1: i32) -> (i32, i32) {
    %c0_i32 = arith.constant 0 : i32
    return %arg0, %arg1 : i32, i32
  }
}

module attributes {stable_mosaic.version = 11 : i64} {
  func.func @kernel(%arg0: i32, %arg1: i32, %arg2: memref<1xf32, #tpu.memory_space<smem>>, %arg3: memref<32x32xi8, #tpu.memory_space<vmem>>, %arg4: memref<32x128xbf16, #tpu.memory_space<vmem>>, %arg5: memref<128x128xbf16, #tpu.memory_space<vmem>>, %arg6: memref<1x128xf32, #tpu.memory_space<vmem>>, %arg7: memref<128x128xbf16, #tpu.memory_space<vmem>>, %arg8: memref<1x128xf32, #tpu.memory_space<vmem>>, %arg9: memref<32x128xf32, #tpu.memory_space<vmem>>, %arg10: memref<32x128xf32, #tpu.memory_space<vmem>>) attributes {dimension_semantics = [#tpu.dimension_semantics<parallel>, #tpu.dimension_semantics<arbitrary>], iteration_bounds = array<i64: 1, 1>, scalar_prefetch = 0 : i64, scratch_operands = 1 : i64, tpu.core_type = #tpu.core_type<tc>, window_params = [{transform_indices = @transform_0, window_bounds = array<i64: 1>}, {transform_indices = @transform_1, window_bounds = array<i64: 32, 32>}, {pipeline_mode = #tpu.pipeline_mode<synchronous>, transform_indices = @transform_2, window_bounds = array<i64: 32, 128>}, {pipeline_mode = #tpu.pipeline_mode<synchronous>, transform_indices = @transform_3, window_bounds = array<i64: 128, 128>}, {pipeline_mode = #tpu.pipeline_mode<synchronous>, transform_indices = @transform_4, window_bounds = array<i64: 1, 128>}, {pipeline_mode = #tpu.pipeline_mode<synchronous>, transform_indices = @transform_5, window_bounds = array<i64: 128, 128>}, {pipeline_mode = #tpu.pipeline_mode<synchronous>, transform_indices = @transform_6, window_bounds = array<i64: 1, 128>}, {transform_indices = @transform_7, window_bounds = array<i64: 32, 128>}]} {
    %c0_i32 = arith.constant 0 : i32
    %0 = arith.cmpi eq, %arg1, %c0_i32 : i32
    %1 = arith.extui %0 : i1 to i32
    %c0_i32_0 = arith.constant 0 : i32
    %2 = arith.cmpi ne, %1, %c0_i32_0 : i32
    scf.if %2 {
      %cst_9 = arith.constant 0.000000e+00 : f32
      %16 = vector.broadcast %cst_9 : f32 to vector<32x128xf32>
      %c0_10 = arith.constant 0 : index
      %c0_11 = arith.constant 0 : index
      %17 = vector.load %arg10[%c0_10, %c0_11] : memref<32x128xf32, #tpu.memory_space<vmem>>, vector<32x128xf32>
      tpu.vector_store %arg10[%c0_10, %c0_11], %16 {strides = array<i32>} : memref<32x128xf32, #tpu.memory_space<vmem>>, vector<32x128xf32>,
    } else {
    }
    %c32_i32 = arith.constant 32 : i32
    %3 = arith.muli %arg1, %c32_i32 : i32
    %4 = tpu.assume_multiple %3, 32 : i32
    %c0 = arith.constant 0 : index
    %c0_1 = arith.constant 0 : index
    %5 = vector.load %arg3[%c0, %c0_1] : memref<32x32xi8, #tpu.memory_space<vmem>>, vector<32x32xi8>
    %6 = arith.sitofp %5 : vector<32x32xi8> to vector<32x32xbf16>
    %c0_2 = arith.constant 0 : index
    %c0_3 = arith.constant 0 : index
    %7 = vector.load %arg10[%c0_2, %c0_3] : memref<32x128xf32, #tpu.memory_space<vmem>>, vector<32x128xf32>
    %8 = arith.index_cast %4 : i32 to index
    %c0_4 = arith.constant 0 : index
    %9 = vector.load %arg4[%8, %c0_4] : memref<32x128xbf16, #tpu.memory_space<vmem>>, vector<32x128xbf16>
    %cst = arith.constant dense<0.000000e+00> : vector<32x128xf32>
    %10 = tpu.matmul %6, %9, %cst {dimension_numbers = #tpu.dot_dimension_numbers<[1], [0], [0], [1], [0, 0, 1, 1], [], []>} : vector<32x32xbf16>, vector<32x128xbf16>, vector<32x128xf32> -> vector<32x128xf32>
    %11 = arith.addf %7, %10 : vector<32x128xf32>
    %c0_5 = arith.constant 0 : index
    %c0_6 = arith.constant 0 : index
    %12 = vector.load %arg10[%c0_5, %c0_6] : memref<32x128xf32, #tpu.memory_space<vmem>>, vector<32x128xf32>
    tpu.vector_store %arg10[%c0_5, %c0_6], %11 {strides = array<i32>} : memref<32x128xf32, #tpu.memory_space<vmem>>, vector<32x128xf32>,
    %c0_i32_7 = arith.constant 0 : i32
    %13 = arith.cmpi eq, %arg1, %c0_i32_7 : i32
    %14 = arith.extui %13 : i1 to i32
    %c0_i32_8 = arith.constant 0 : i32
    %15 = arith.cmpi ne, %14, %c0_i32_8 : i32
    scf.if %15 {
      %c32_i32_9 = arith.constant 32 : i32
      %16 = arith.muli %arg0, %c32_i32_9 : i32
      %17 = tpu.assume_multiple %16, 32 : i32
      %18 = arith.index_cast %17 : i32 to index
      %c0_10 = arith.constant 0 : index
      %19 = vector.load %arg4[%18, %c0_10] : memref<32x128xbf16, #tpu.memory_space<vmem>>, vector<32x128xbf16>
      %20 = arith.extf %19 : vector<32x128xbf16> to vector<32x128xf32>
      %c0_11 = arith.constant 0 : index
      %c0_12 = arith.constant 0 : index
      %21 = vector.load %arg10[%c0_11, %c0_12] : memref<32x128xf32, #tpu.memory_space<vmem>>, vector<32x128xf32>
      %c0_13 = arith.constant 0 : index
      %22 = memref.load %arg2[%c0_13] : memref<1xf32, #tpu.memory_space<smem>>
      %cst_14 = arith.constant 1.000000e+00 : f32
      %23 = arith.addf %cst_14, %22 : f32
      %24 = vector.broadcast %23 : f32 to vector<32x128xf32>
      %25 = arith.mulf %24, %20 : vector<32x128xf32>
      %26 = arith.addf %21, %25 : vector<32x128xf32>
      %27 = arith.truncf %26 : vector<32x128xf32> to vector<32x128xbf16>
      %c0_15 = arith.constant 0 : index
      %c0_16 = arith.constant 0 : index
      %28 = vector.load %arg5[%c0_15, %c0_16] : memref<128x128xbf16, #tpu.memory_space<vmem>>, vector<128x128xbf16>
      %cst_17 = arith.constant dense<0.000000e+00> : vector<32x128xf32>
      %29 = tpu.matmul %27, %28, %cst_17 {dimension_numbers = #tpu.dot_dimension_numbers<[1], [0], [0], [1], [0, 0, 1, 1], [], []>} : vector<32x128xbf16>, vector<128x128xbf16>, vector<32x128xf32> -> vector<32x128xf32>
      %c0_18 = arith.constant 0 : index
      %c0_19 = arith.constant 0 : index
      %30 = vector.load %arg6[%c0_18, %c0_19] : memref<1x128xf32, #tpu.memory_space<vmem>>, vector<1x128xf32>
      %31 = vector.broadcast %30 : vector<1x128xf32> to vector<32x128xf32>
      %32 = arith.addf %29, %31 : vector<32x128xf32>
      %cst_20 = arith.constant 0.000000e+00 : f32
      %33 = vector.broadcast %cst_20 : f32 to vector<32x128xf32>
      %34 = arith.maximumf %32, %33 : vector<32x128xf32>
      %35 = arith.truncf %34 : vector<32x128xf32> to vector<32x128xbf16>
      %c0_21 = arith.constant 0 : index
      %c0_22 = arith.constant 0 : index
      %36 = vector.load %arg7[%c0_21, %c0_22] : memref<128x128xbf16, #tpu.memory_space<vmem>>, vector<128x128xbf16>
      %cst_23 = arith.constant dense<0.000000e+00> : vector<32x128xf32>
      %37 = tpu.matmul %35, %36, %cst_23 {dimension_numbers = #tpu.dot_dimension_numbers<[1], [0], [0], [1], [0, 0, 1, 1], [], []>} : vector<32x128xbf16>, vector<128x128xbf16>, vector<32x128xf32> -> vector<32x128xf32>
      %c0_24 = arith.constant 0 : index
      %c0_25 = arith.constant 0 : index
      %38 = vector.load %arg8[%c0_24, %c0_25] : memref<1x128xf32, #tpu.memory_space<vmem>>, vector<1x128xf32>
      %39 = vector.broadcast %38 : vector<1x128xf32> to vector<32x128xf32>
      %40 = arith.addf %37, %39 : vector<32x128xf32>
      %cst_26 = arith.constant 0.000000e+00 : f32
      %41 = vector.broadcast %cst_26 : f32 to vector<32x128xf32>
      %42 = arith.maximumf %40, %41 : vector<32x128xf32>
      %c0_27 = arith.constant 0 : index
      %c0_28 = arith.constant 0 : index
      %43 = vector.load %arg9[%c0_27, %c0_28] : memref<32x128xf32, #tpu.memory_space<vmem>>, vector<32x128xf32>
      tpu.vector_store %arg9[%c0_27, %c0_28], %42 {strides = array<i32>} : memref<32x128xf32, #tpu.memory_space<vmem>>, vector<32x128xf32>,
    } else {
    }
    return
  }
  func.func @transform_0(%arg0: i32, %arg1: i32) -> i32 {
    %c0_i32 = arith.constant 0 : i32
    %c0_i32_0 = arith.constant 0 : i32
    return %c0_i32 : i32
  }
  func.func @transform_1(%arg0: i32, %arg1: i32) -> (i32, i32) {
    %c0_i32 = arith.constant 0 : i32
    return %arg0, %arg1 : i32, i32
  }
  func.func @transform_2(%arg0: i32, %arg1: i32) -> (i32, i32) {
    %c0_i32 = arith.constant 0 : i32
    %c0_i32_0 = arith.constant 0 : i32
    %c0_i32_1 = arith.constant 0 : i32
    return %c0_i32, %c0_i32_0 : i32, i32
  }
  func.func @transform_3(%arg0: i32, %arg1: i32) -> (i32, i32) {
    %c0_i32 = arith.constant 0 : i32
    %c0_i32_0 = arith.constant 0 : i32
    %c0_i32_1 = arith.constant 0 : i32
    return %c0_i32, %c0_i32_0 : i32, i32
  }
  func.func @transform_4(%arg0: i32, %arg1: i32) -> (i32, i32) {
    %c0_i32 = arith.constant 0 : i32
    %c0_i32_0 = arith.constant 0 : i32
    %c0_i32_1 = arith.constant 0 : i32
    return %c0_i32, %c0_i32_0 : i32, i32
  }
  func.func @transform_5(%arg0: i32, %arg1: i32) -> (i32, i32) {
    %c0_i32 = arith.constant 0 : i32
    %c0_i32_0 = arith.constant 0 : i32
    %c0_i32_1 = arith.constant 0 : i32
    return %c0_i32, %c0_i32_0 : i32, i32
  }
  func.func @transform_6(%arg0: i32, %arg1: i32) -> (i32, i32) {
    %c0_i32 = arith.constant 0 : i32
    %c0_i32_0 = arith.constant 0 : i32
    %c0_i32_1 = arith.constant 0 : i32
    return %c0_i32, %c0_i32_0 : i32, i32
  }
  func.func @transform_7(%arg0: i32, %arg1: i32) -> (i32, i32) {
    %c0_i32 = arith.constant 0 : i32
    %c0_i32_0 = arith.constant 0 : i32
    return %arg0, %c0_i32 : i32, i32
  }
}

</mosaic_0001>

<llo_original>
// kernel: hon_augmentor_forward.5
$region0: #{hon_augmentor_forward.5}
  #allocation0 [shape = 'u32[]', space=smem, size = 0x4, offset = 0x4, fixed_abs, tag = 'smem constant byte address 0x4 - core index']
  #allocation1 [shape = 'u32[144,128]{1,0:T(1,128)}', space=vmem, size = 0x12000, scoped, tag = 'internal scratch']
  %s0 = inlined_call_operand.vmem [shape: bf16[32,128], index: 0, kind: input, shape index: {}, may-alias: {0,1}]
  %s1 = inlined_call_operand.vmem [shape: bf16[32,128], index: 1, kind: input, shape index: {}, may-alias: {0,1}]
  %s2 = inlined_call_operand.vmem [shape: s32[32,1], index: 2, kind: input, shape index: {}]
  %s3 = inlined_call_operand.vmem [shape: s32[1,32], index: 3, kind: input, shape index: {}]
  %s4 = inlined_call_operand.vmem [shape: f32[32,32], index: 4, kind: output, shape index: {}]
  %s5 = sld [smem:[#allocation0]]
  $region26: #{hon_augmentor_forward.5} parent=0
    _
  %s7 = ssub.s32 1, %s5
  %s8 = scalar_select 0, %s7, %s5
  // Predicated region
  $region2: #{hon_augmentor_forward.5} parent=0 // pred_check
    _
  $region3: #{hon_augmentor_forward.5} parent=0 // pred_check_branch
    %10 = sbr.rel (0) target = $region5
  $region4: #{hon_augmentor_forward.5} parent=0 // pred_region
    _
  $region5: #{hon_augmentor_forward.5} parent=0 // pred_fallthru
    _
  // Predicated region
  $region6: #{hon_augmentor_forward.5} parent=0 // pred_check
    _
  $region7: #{hon_augmentor_forward.5} parent=0 // pred_check_branch
    %12 = sbr.rel (0) target = $region9
  $region8: #{hon_augmentor_forward.5} parent=0 // pred_region
    _
  $region9: #{hon_augmentor_forward.5} parent=0 // pred_fallthru
    _
  // Predicated region
  $region10: #{hon_augmentor_forward.5} parent=0 // pred_check
    _
  $region11: #{hon_augmentor_forward.5} parent=0 // pred_check_branch
    %14 = sbr.rel (0) target = $region13
  $region12: #{hon_augmentor_forward.5} parent=0 // pred_region
    _
  $region13: #{hon_augmentor_forward.5} parent=0 // pred_fallthru
    _
  // Predicated region
  $region14: #{hon_augmentor_forward.5} parent=0 // pred_check
    _
  $region15: #{hon_augmentor_forward.5} parent=0 // pred_check_branch
    %16 = sbr.rel (0) target = $region17
  $region16: #{hon_augmentor_forward.5} parent=0 // pred_region
    _
  $region17: #{hon_augmentor_forward.5} parent=0 // pred_fallthru
    _
  %v18 = vld [vmem:[%s0] sm:$0xf]
  %v19 = vld [vmem:[%s0 + $0x4] sm:$0xf]
  %v20 = vld [vmem:[%s0 + $0x8] sm:$0xf]
  %v21 = vld [vmem:[%s0 + $0xc] sm:$0xf]
  %v22 = vld [vmem:[%s1] sm:$0xf]
  %v23 = vld [vmem:[%s1 + $0x4] sm:$0xf]
  %v24 = vld [vmem:[%s1 + $0x8] sm:$0xf]
  %v25 = vld [vmem:[%s1 + $0xc] sm:$0xf]
  %v30 = vunpack.c.l.b16 %v18
  %v31 = vunpack.c.l.b16 %v19
  %v32 = vunpack.c.l.b16 %v20
  %v33 = vunpack.c.l.b16 %v21
  %v34 = vpack.c.b16 %v31, %v30
  %v35 = vpack.c.b16 %v33, %v32
  %v42 = vunpack.c.l.b16 %v22
  %v43 = vunpack.c.l.b16 %v23
  %v44 = vunpack.c.l.b16 %v24
  %v45 = vunpack.c.l.b16 %v25
  %v46 = vpack.c.b16 %v43, %v42
  %v47 = vpack.c.b16 %v45, %v44
  %50 = vmatprep.subr.bf16.mxu0 0
  %51 = vmatpush1.bf16.xpose.msra.mxu0 %v46
  %52 = vmatprep.subr.bf16.mxu0 0
  %53 = vmatpush1.bf16.xpose.msra.mxu0 %v47
  %54 = vmatprep.subr.bf16.mxu0 0
  %55 = vmatpush1.bf16.xpose.msra.mxu0 0
  %56 = vmatprep.subr.bf16.mxu0 0
  %57 = vmatpush1.bf16.xpose.msra.mxu0 0
  %58 = vmatprep.subr.bf16.mxu0 0
  %59 = vmatpush1.bf16.xpose.msra.mxu0 0
  %60 = vmatprep.subr.bf16.mxu0 0
  %61 = vmatpush1.bf16.xpose.msra.mxu0 0
  %62 = vmatprep.subr.bf16.mxu0 0
  %63 = vmatpush1.bf16.xpose.msra.mxu0 0
  %64 = vmatprep.subr.bf16.mxu0 0
  %65 = vmatpush1.bf16.xpose.msra.mxu0 0
  %66 = vmatprep.subr.bf16.mxu0 0
  %67 = vmatpush1.bf16.xpose.msra.mxu0 0
  %68 = vmatprep.subr.bf16.mxu0 0
  %69 = vmatpush1.bf16.xpose.msra.mxu0 0
  %70 = vmatprep.subr.bf16.mxu0 0
  %71 = vmatpush1.bf16.xpose.msra.mxu0 0
  %72 = vmatprep.subr.bf16.mxu0 0
  %73 = vmatpush1.bf16.xpose.msra.mxu0 0
  %74 = vmatprep.subr.bf16.mxu0 0
  %75 = vmatpush1.bf16.xpose.msra.mxu0 0
  %76 = vmatprep.subr.bf16.mxu0 0
  %77 = vmatpush1.bf16.xpose.msra.mxu0 0
  %78 = vmatprep.subr.bf16.mxu0 0
  %79 = vmatpush1.bf16.xpose.msra.mxu0 0
  %80 = vmatprep.subr.bf16.mxu0 0
  %81 = vmatpush1.bf16.xpose.msra.mxu0 0
  %82 = vmatprep.mubr.bf16.mxu0 0
  %83 = vmatmul.mubr.bf16.gmra.mrb[0].mxu0 %v34
  %v84 = vpop.f32.mrb[0].mxu0
  %v85 = vadd.f32 0.0, %v84
  %v86 = vpop.f32.mrb[0].mxu0
  %v87 = vpop.f32.mrb[0].mxu0
  %v88 = vadd.f32 0.0, %v87
  %v89 = vpop.f32.mrb[0].mxu0
  %90 = vmatprep.mubr.bf16.mxu0 0
  %91 = vmatmul.mubr.bf16.gmra.mrb[0].mxu0 %v35
  %v92 = vpop.f32.mrb[0].mxu0
  %v93 = vadd.f32 0.0, %v92
  %v94 = vpop.f32.mrb[0].mxu0
  %v95 = vpop.f32.mrb[0].mxu0
  %v96 = vadd.f32 0.0, %v95
  %v97 = vpop.f32.mrb[0].mxu0
  %98 = vdwg.mxu0
  %v99 = vld [vmem:[%s2] sm:$0xff]
  %v100 = vld [vmem:[%s2 + $0x8] sm:$0xff]
  %v101 = vld [vmem:[%s2 + $0x10] sm:$0xff]
  %v102 = vld [vmem:[%s2 + $0x18] sm:$0xff]
  %v103 = vld [vmem:[%s3] sm:$0x1]
  %104 = vset.pattern.permute.xlu0 0
  %105 = vperm.xlu0 %104, %v99
  %v106 = vpop.permute.xlu0 %105
  %107 = vset.pattern.permute.xlu0 0
  %108 = vperm.xlu0 %107, %v100
  %v109 = vpop.permute.xlu0 %108
  %110 = vset.pattern.permute.xlu0 0
  %111 = vperm.xlu0 %110, %v101
  %v112 = vpop.permute.xlu0 %111
  %113 = vset.pattern.permute.xlu0 0
  %114 = vperm.xlu0 %113, %v102
  %v115 = vpop.permute.xlu0 %114
  %v116 = vlaneseq
  %v117 = vshrl.u32 %v116, 7
  %v118 = vsub.s32 0, %v117
  %v119 = vrot.slane %v103, %v118
  %vm120 = vcmp.eq.s32.totalorder %v106, %v119
  %vm121 = vcmp.eq.s32.totalorder %v109, %v119
  %vm122 = vcmp.eq.s32.totalorder %v112, %v119
  %vm123 = vcmp.eq.s32.totalorder %v115, %v119
  %vm124 = vcmp.ge.s32.totalorder %v99, 0
  %vm125 = vcmp.ge.s32.totalorder %v100, 0
  %vm126 = vcmp.ge.s32.totalorder %v101, 0
  %vm127 = vcmp.ge.s32.totalorder %v102, 0
  %v128 = vsel %vm124, 1, 0
  %v129 = vsel %vm125, 1, 0
  %v130 = vsel %vm126, 1, 0
  %v131 = vsel %vm127, 1, 0
  %132 = vset.pattern.permute.xlu0 0
  %133 = vperm.xlu0 %132, %v128
  %v134 = vpop.permute.xlu0 %133
  %135 = vset.pattern.permute.xlu0 0
  %136 = vperm.xlu0 %135, %v129
  %v137 = vpop.permute.xlu0 %136
  %138 = vset.pattern.permute.xlu0 0
  %139 = vperm.xlu0 %138, %v130
  %v140 = vpop.permute.xlu0 %139
  %141 = vset.pattern.permute.xlu0 0
  %142 = vperm.xlu0 %141, %v131
  %v143 = vpop.permute.xlu0 %142
  %vm144 = vcmp.eq.s32.totalorder %v134, 1
  %vm145 = vcmp.eq.s32.totalorder %v137, 1
  %vm146 = vcmp.eq.s32.totalorder %v140, 1
  %vm147 = vcmp.eq.s32.totalorder %v143, 1
  %vm148 = vmand %vm120, %vm144
  %vm149 = vmand %vm121, %vm145
  %vm150 = vmand %vm122, %vm146
  %vm151 = vmand %vm123, %vm147
  %vm152 = vcmp.ge.s32.totalorder %v103, 0
  %v153 = vsel %vm152, 1, 0
  %v154 = vlaneseq
  %v155 = vshrl.u32 %v154, 7
  %v156 = vsub.s32 0, %v155
  %v157 = vrot.slane %v153, %v156
  %vm158 = vcmp.eq.s32.totalorder %v157, 1
  %vm159 = vmand %vm148, %vm158
  %vm160 = vmand %vm149, %vm158
  %vm161 = vmand %vm150, %vm158
  %vm162 = vmand %vm151, %vm158
  %v163 = vsel %vm159, %v85, -inf
  %v164 = vsel %vm160, %v88, -inf
  %v165 = vsel %vm161, %v93, -inf
  %v166 = vsel %vm162, %v96, -inf
  %vm167 = vcmask 261120
  %168 = vst.msk [vmem:[%s4] sm:$0xff] %vm167, %v163
  %169 = vst.msk [vmem:[%s4 + $0x8] sm:$0xff] %vm167, %v164
  %170 = vst.msk [vmem:[%s4 + $0x10] sm:$0xff] %vm167, %v165
  %171 = vst.msk [vmem:[%s4 + $0x18] sm:$0xff] %vm167, %v166
  // Predicated region
  $region18: #{hon_augmentor_forward.5} parent=0 // pred_check
    _
  $region19: #{hon_augmentor_forward.5} parent=0 // pred_check_branch
    %173 = sbr.rel (0) target = $region21
  $region20: #{hon_augmentor_forward.5} parent=0 // pred_region
    _
  $region21: #{hon_augmentor_forward.5} parent=0 // pred_fallthru
    _
  // Predicated region
  $region22: #{hon_augmentor_forward.5} parent=0 // pred_check
    _
  $region23: #{hon_augmentor_forward.5} parent=0 // pred_check_branch
    %175 = sbr.rel (0) target = $region25
  $region24: #{hon_augmentor_forward.5} parent=0 // pred_region
    _
  $region25: #{hon_augmentor_forward.5} parent=0 // pred_fallthru
    _

// kernel: hon_augmentor_forward.4
$region0: #{hon_augmentor_forward.4}
  #allocation0 [shape = 'u32[]', space=smem, size = 0x4, offset = 0x4, fixed_abs, tag = 'smem constant byte address 0x4 - core index']
  #allocation1 [shape = 'u32[144,128]{1,0:T(1,128)}', space=vmem, size = 0x12000, scoped, tag = 'internal scratch']
  #allocation2 [shape = 'f32[32,128]{1,0:T(8,128)}', space=vmem, size = 0x4000, scoped, tag = 'scratch operand']
  #allocation3 [shape = 'f32[1]{0:T(128)S(6)}', space=smem, size = 0x200, scoped, tag = 'scoped memory for hon_augmentor_forward.4']
  %s0 = inlined_call_operand.<no memory space> [shape: f32[1], index: 0, kind: input, shape index: {}]
  %s1 = inlined_call_operand.vmem [shape: s8[32,32], index: 1, kind: input, shape index: {}]
  %s2 = inlined_call_operand.vmem [shape: bf16[32,128], index: 2, kind: input, shape index: {}]
  %s3 = inlined_call_operand.vmem [shape: bf16[128,128], index: 3, kind: input, shape index: {}]
  %s4 = inlined_call_operand.vmem [shape: f32[1,128], index: 4, kind: input, shape index: {}]
  %s5 = inlined_call_operand.vmem [shape: bf16[128,128], index: 5, kind: input, shape index: {}]
  %s6 = inlined_call_operand.vmem [shape: f32[1,128], index: 6, kind: input, shape index: {}]
  %s7 = inlined_call_operand.vmem [shape: f32[32,128], index: 7, kind: output, shape index: {}]
  %s8 = sld [smem:[#allocation0]]
  $region46: #{hon_augmentor_forward.4} parent=0
    _
  %s10 = ssub.s32 1, %s8
  %s11 = scalar_select 0, %s10, %s8
  %12 = sst [smem:[#allocation3]] %s0
  // Predicated region
  $region2: #{hon_augmentor_forward.4} parent=0 // pred_check
    _
  $region3: #{hon_augmentor_forward.4} parent=0 // pred_check_branch
    %14 = sbr.rel (0) target = $region5
  $region4: #{hon_augmentor_forward.4} parent=0 // pred_region
    _
  $region5: #{hon_augmentor_forward.4} parent=0 // pred_fallthru
    _
  // Predicated region
  $region6: #{hon_augmentor_forward.4} parent=0 // pred_check
    _
  $region7: #{hon_augmentor_forward.4} parent=0 // pred_check_branch
    %16 = sbr.rel (0) target = $region9
  $region8: #{hon_augmentor_forward.4} parent=0 // pred_region
    _
  $region9: #{hon_augmentor_forward.4} parent=0 // pred_fallthru
    _
  // Predicated region
  $region10: #{hon_augmentor_forward.4} parent=0 // pred_check
    _
  $region11: #{hon_augmentor_forward.4} parent=0 // pred_check_branch
    %18 = sbr.rel (0) target = $region13
  $region12: #{hon_augmentor_forward.4} parent=0 // pred_region
    _
  $region13: #{hon_augmentor_forward.4} parent=0 // pred_fallthru
    _
  // Predicated region
  $region14: #{hon_augmentor_forward.4} parent=0 // pred_check
    _
  $region15: #{hon_augmentor_forward.4} parent=0 // pred_check_branch
    %20 = sbr.rel (0) target = $region17
  $region16: #{hon_augmentor_forward.4} parent=0 // pred_region
    _
  $region17: #{hon_augmentor_forward.4} parent=0 // pred_fallthru
    _
  // Predicated region
  $region18: #{hon_augmentor_forward.4} parent=0 // pred_check
    _
  $region19: #{hon_augmentor_forward.4} parent=0 // pred_check_branch
    %22 = sbr.rel (0) target = $region21
  $region20: #{hon_augmentor_forward.4} parent=0 // pred_region
    _
  $region21: #{hon_augmentor_forward.4} parent=0 // pred_fallthru
    _
  // Predicated region
  $region22: #{hon_augmentor_forward.4} parent=0 // pred_check
    _
  $region23: #{hon_augmentor_forward.4} parent=0 // pred_check_branch
    %24 = sbr.rel (0) target = $region25
  $region24: #{hon_augmentor_forward.4} parent=0 // pred_region
    _
  $region25: #{hon_augmentor_forward.4} parent=0 // pred_fallthru
    _
  // Predicated region
  $region26: #{hon_augmentor_forward.4} parent=0 // pred_check
    _
  $region27: #{hon_augmentor_forward.4} parent=0 // pred_check_branch
    %26 = sbr.rel (0) target = $region29
  $region28: #{hon_augmentor_forward.4} parent=0 // pred_region
    _
  $region29: #{hon_augmentor_forward.4} parent=0 // pred_fallthru
    _
  %p28 = scmp.eq.s32.totalorder 0, 0
  // Predicated region
  $region30: #{hon_augmentor_forward.4} parent=0 // pred_check
    %p29 = pneg %p28
  $region31: #{hon_augmentor_forward.4} parent=0 // pred_check_branch
    %31 = sbr.rel (%p29) target = $region33
  $region32: #{hon_augmentor_forward.4} parent=0 // pred_region
    %32 = vst [vmem:[#allocation2] sm:$0xff] 0.0
    %33 = vst [vmem:[#allocation2 + $0x8] sm:$0xff] 0.0
    %34 = vst [vmem:[#allocation2 + $0x10] sm:$0xff] 0.0
    %35 = vst [vmem:[#allocation2 + $0x18] sm:$0xff] 0.0
  $region33: #{hon_augmentor_forward.4} parent=0 // pred_fallthru
    _
  %s36 = smul.u32 0, 32
  %v37 = vld [vmem:[%s1] sm:$0x3]
  %v38 = vld [vmem:[%s1 + $0x2] sm:$0x3]
  %v39 = vld [vmem:[%s1 + $0x4] sm:$0x3]
  %v40 = vld [vmem:[%s1 + $0x6] sm:$0x3]
  %v41 = vunpack.c.l.s8.bf16 %v37
  %v42 = vunpack.c.l.s8.bf16 %v38
  %v43 = vunpack.c.l.s8.bf16 %v39
  %v44 = vunpack.c.l.s8.bf16 %v40
  %v45 = vld [vmem:[#allocation2] sm:$0xff]
  %v46 = vld [vmem:[#allocation2 + $0x8] sm:$0xff]
  %v47 = vld [vmem:[#allocation2 + $0x10] sm:$0xff]
  %v48 = vld [vmem:[#allocation2 + $0x18] sm:$0xff]
  %s49 = sshra.s32 %s36, 3
  %s50 = sand.u32 %s36, 7
  %s51 = smul.addr %s49, 4
  %s52 = scalar_lea.vmem %s2, %s51
  %v53 = vld [vmem:[%s52] sm:$0xf]
  %v54 = vld [vmem:[%s52 + $0x4] sm:$0xf]
  %v55 = vld [vmem:[%s52 + $0x8] sm:$0xf]
  %v56 = vld [vmem:[%s52 + $0xc] sm:$0xf]
  %v61 = vunpack.c.l.b16 %v41
  %v62 = vunpack.c.l.b16 %v42
  %v63 = vunpack.c.l.b16 %v43
  %v64 = vunpack.c.l.b16 %v44
  %v65 = vpack.c.b16 %v62, %v61
  %v66 = vpack.c.b16 %v64, %v63
  %v71 = vunpack.c.l.b16 %v53
  %v72 = vunpack.c.l.b16 %v54
  %v73 = vunpack.c.l.b16 %v55
  %v74 = vunpack.c.l.b16 %v56
  %v75 = vpack.c.b16 %v72, %v71
  %v76 = vpack.c.b16 %v74, %v73
  %vm79 = vcmask 261120
  %v81 = vsel %vm79, %v65, 0
  %v84 = vsel %vm79, %v66, 0
  %86 = vmatprep.subr.bf16.mxu0 0
  %87 = vmatpush1.bf16.msra.mxu0 %v75
  %88 = vmatprep.subr.bf16.mxu0 0
  %89 = vmatpush1.bf16.msra.mxu0 %v76
  %90 = vmatprep.subr.bf16.mxu0 0
  %91 = vmatpush1.bf16.msra.mxu0 0
  %92 = vmatprep.subr.bf16.mxu0 0
  %93 = vmatpush1.bf16.msra.mxu0 0
  %94 = vmatprep.subr.bf16.mxu0 0
  %95 = vmatpush1.bf16.msra.mxu0 0
  %96 = vmatprep.subr.bf16.mxu0 0
  %97 = vmatpush1.bf16.msra.mxu0 0
  %98 = vmatprep.subr.bf16.mxu0 0
  %99 = vmatpush1.bf16.msra.mxu0 0
  %100 = vmatprep.subr.bf16.mxu0 0
  %101 = vmatpush1.bf16.msra.mxu0 0
  %102 = vmatprep.subr.bf16.mxu0 0
  %103 = vmatpush1.bf16.msra.mxu0 0
  %104 = vmatprep.subr.bf16.mxu0 0
  %105 = vmatpush1.bf16.msra.mxu0 0
  %106 = vmatprep.subr.bf16.mxu0 0
  %107 = vmatpush1.bf16.msra.mxu0 0
  %108 = vmatprep.subr.bf16.mxu0 0
  %109 = vmatpush1.bf16.msra.mxu0 0
  %110 = vmatprep.subr.bf16.mxu0 0
  %111 = vmatpush1.bf16.msra.mxu0 0
  %112 = vmatprep.subr.bf16.mxu0 0
  %113 = vmatpush1.bf16.msra.mxu0 0
  %114 = vmatprep.subr.bf16.mxu0 0
  %115 = vmatpush1.bf16.msra.mxu0 0
  %116 = vmatprep.subr.bf16.mxu0 0
  %117 = vmatpush1.bf16.msra.mxu0 0
  %118 = vmatprep.mubr.bf16.mxu0 0
  %119 = vmatmul.mubr.bf16.gmra.mrb[0].mxu0 %v81
  %v120 = vpop.f32.mrb[0].mxu0
  %v121 = vadd.f32 0.0, %v120
  %v122 = vpop.f32.mrb[0].mxu0
  %v123 = vpop.f32.mrb[0].mxu0
  %v124 = vadd.f32 0.0, %v123
  %v125 = vpop.f32.mrb[0].mxu0
  %126 = vmatprep.mubr.bf16.mxu0 0
  %127 = vmatmul.mubr.bf16.gmra.mrb[0].mxu0 %v84
  %v128 = vpop.f32.mrb[0].mxu0
  %v129 = vadd.f32 0.0, %v128
  %v130 = vpop.f32.mrb[0].mxu0
  %v131 = vpop.f32.mrb[0].mxu0
  %v132 = vadd.f32 0.0, %v131
  %v133 = vpop.f32.mrb[0].mxu0
  %134 = vdwg.mxu0
  %v135 = vadd.f32 %v45, %v121
  %v136 = vadd.f32 %v46, %v124
  %v137 = vadd.f32 %v47, %v129
  %v138 = vadd.f32 %v48, %v132
  %139 = vst [vmem:[#allocation2] sm:$0xff] %v135
  %140 = vst [vmem:[#allocation2 + $0x8] sm:$0xff] %v136
  %141 = vst [vmem:[#allocation2 + $0x10] sm:$0xff] %v137
  %142 = vst [vmem:[#allocation2 + $0x18] sm:$0xff] %v138
  // Predicated region
  $region34: #{hon_augmentor_forward.4} parent=0 // pred_check
    %p143 = pneg %p28
  $region35: #{hon_augmentor_forward.4} parent=0 // pred_check_branch
    %145 = sbr.rel (%p143) target = $region37
  $region36: #{hon_augmentor_forward.4} parent=0 // pred_region
    %s146 = smul.u32 0, 32
    %s147 = sshra.s32 %s146, 3
    %s148 = sand.u32 %s146, 7
    %s149 = smul.addr %s147, 4
    %s150 = scalar_lea.vmem %s2, %s149
    %v151 = vld [vmem:[%s150] sm:$0xf]
    %v152 = vld [vmem:[%s150 + $0x4] sm:$0xf]
    %v153 = vld [vmem:[%s150 + $0x8] sm:$0xf]
    %v154 = vld [vmem:[%s150 + $0xc] sm:$0xf]
    %v155 = vunpack.c.l.bf16 %v151
    %v156 = vunpack.c.l.bf16 %v152
    %v157 = vunpack.c.l.bf16 %v153
    %v158 = vunpack.c.l.bf16 %v154
    %v159 = vld [vmem:[#allocation2] sm:$0xff]
    %v160 = vld [vmem:[#allocation2 + $0x8] sm:$0xff]
    %v161 = vld [vmem:[#allocation2 + $0x10] sm:$0xff]
    %v162 = vld [vmem:[#allocation2 + $0x18] sm:$0xff]
    %s163 = sld [smem:[#allocation3]]
    %s164 = sadd.f32 %s163, 1.0
    %v165 = vstv %s164
    %v166 = vmul.f32 %v165, %v155
    %v167 = vmul.f32 %v165, %v156
    %v168 = vmul.f32 %v165, %v157
    %v169 = vmul.f32 %v165, %v158
    %v170 = vadd.f32 %v159, %v166
    %v171 = vadd.f32 %v160, %v167
    %v172 = vadd.f32 %v161, %v168
    %v173 = vadd.f32 %v162, %v169
    %v174 = vpack.c.bf16 %v171, %v170
    %v175 = vpack.c.bf16 %v173, %v172
    %v176 = vld [vmem:[%s3] sm:$0xf]
    %v177 = vld [vmem:[%s3 + $0x4] sm:$0xf]
    %v178 = vld [vmem:[%s3 + $0x8] sm:$0xf]
    %v179 = vld [vmem:[%s3 + $0xc] sm:$0xf]
    %v180 = vld [vmem:[%s3 + $0x10] sm:$0xf]
    %v181 = vld [vmem:[%s3 + $0x14] sm:$0xf]
    %v182 = vld [vmem:[%s3 + $0x18] sm:$0xf]
    %v183 = vld [vmem:[%s3 + $0x1c] sm:$0xf]
    %v184 = vld [vmem:[%s3 + $0x20] sm:$0xf]
    %v185 = vld [vmem:[%s3 + $0x24] sm:$0xf]
    %v186 = vld [vmem:[%s3 + $0x28] sm:$0xf]
    %v187 = vld [vmem:[%s3 + $0x2c] sm:$0xf]
    %v188 = vld [vmem:[%s3 + $0x30] sm:$0xf]
    %v189 = vld [vmem:[%s3 + $0x34] sm:$0xf]
    %v190 = vld [vmem:[%s3 + $0x38] sm:$0xf]
    %v191 = vld [vmem:[%s3 + $0x3c] sm:$0xf]
    %v192 = vld [vmem:[%s4] sm:$0x1]
    %v194 = vlaneseq
    %v195 = vshrl.u32 %v194, 7
    %v196 = vsub.s32 0, %v195
    %v197 = vrot.slane %v192, %v196
    %v215 = vunpack.c.l.b16 %v176
    %v216 = vunpack.c.l.b16 %v177
    %v217 = vunpack.c.l.b16 %v178
    %v218 = vunpack.c.l.b16 %v179
    %v219 = vunpack.c.l.b16 %v180
    %v220 = vunpack.c.l.b16 %v181
    %v221 = vunpack.c.l.b16 %v182
    %v222 = vunpack.c.l.b16 %v183
    %v223 = vunpack.c.l.b16 %v184
    %v224 = vunpack.c.l.b16 %v185
    %v225 = vunpack.c.l.b16 %v186
    %v226 = vunpack.c.l.b16 %v187
    %v227 = vunpack.c.l.b16 %v188
    %v228 = vunpack.c.l.b16 %v189
    %v229 = vunpack.c.l.b16 %v190
    %v230 = vunpack.c.l.b16 %v191
    %v231 = vpack.c.b16 %v216, %v215
    %v232 = vpack.c.b16 %v218, %v217
    %v233 = vpack.c.b16 %v220, %v219
    %v234 = vpack.c.b16 %v222, %v221
    %v235 = vpack.c.b16 %v224, %v223
    %v236 = vpack.c.b16 %v226, %v225
    %v237 = vpack.c.b16 %v228, %v227
    %v238 = vpack.c.b16 %v230, %v229
    %247 = vmatprep.subr.bf16.mxu0 0
    %248 = vmatpush1.bf16.msra.mxu0 %v231
    %249 = vmatprep.subr.bf16.mxu0 0
    %250 = vmatpush1.bf16.msra.mxu0 %v232
    %251 = vmatprep.subr.bf16.mxu0 0
    %252 = vmatpush1.bf16.msra.mxu0 %v233
    %253 = vmatprep.subr.bf16.mxu0 0
    %254 = vmatpush1.bf16.msra.mxu0 %v234
    %255 = vmatprep.subr.bf16.mxu0 0
    %256 = vmatpush1.bf16.msra.mxu0 %v235
    %257 = vmatprep.subr.bf16.mxu0 0
    %258 = vmatpush1.bf16.msra.mxu0 %v236
    %259 = vmatprep.subr.bf16.mxu0 0
    %260 = vmatpush1.bf16.msra.mxu0 %v237
    %261 = vmatprep.subr.bf16.mxu0 0
    %262 = vmatpush1.bf16.msra.mxu0 %v238
    %263 = vmatprep.subr.bf16.mxu0 0
    %264 = vmatpush1.bf16.msra.mxu0 0
    %265 = vmatprep.subr.bf16.mxu0 0
    %266 = vmatpush1.bf16.msra.mxu0 0
    %267 = vmatprep.subr.bf16.mxu0 0
    %268 = vmatpush1.bf16.msra.mxu0 0
    %269 = vmatprep.subr.bf16.mxu0 0
    %270 = vmatpush1.bf16.msra.mxu0 0
    %271 = vmatprep.subr.bf16.mxu0 0
    %272 = vmatpush1.bf16.msra.mxu0 0
    %273 = vmatprep.subr.bf16.mxu0 0
    %274 = vmatpush1.bf16.msra.mxu0 0
    %275 = vmatprep.subr.bf16.mxu0 0
    %276 = vmatpush1.bf16.msra.mxu0 0
    %277 = vmatprep.subr.bf16.mxu0 0
    %278 = vmatpush1.bf16.msra.mxu0 0
    %279 = vmatprep.mubr.bf16.mxu0 0
    %280 = vmatmul.mubr.bf16.gmra.mrb[0].mxu0 %v174
    %v281 = vpop.f32.mrb[0].mxu0
    %v282 = vadd.f32 %v197, %v281
    %v283 = vpop.f32.mrb[0].mxu0
    %v284 = vpop.f32.mrb[0].mxu0
    %v285 = vadd.f32 %v197, %v284
    %v286 = vpop.f32.mrb[0].mxu0
    %287 = vmatprep.mubr.bf16.mxu0 0
    %288 = vmatmul.mubr.bf16.gmra.mrb[0].mxu0 %v175
    %v289 = vpop.f32.mrb[0].mxu0
    %v290 = vadd.f32 %v197, %v289
    %v291 = vpop.f32.mrb[0].mxu0
    %v292 = vpop.f32.mrb[0].mxu0
    %v293 = vadd.f32 %v197, %v292
    %v294 = vpop.f32.mrb[0].mxu0
    %295 = vdwg.mxu0
    %v296 = vmax.f32 %v282, 0.0
    %v297 = vmax.f32 %v285, 0.0
    %v298 = vmax.f32 %v290, 0.0
    %v299 = vmax.f32 %v293, 0.0
    %v300 = vpack.c.bf16 %v297, %v296
    %v301 = vpack.c.bf16 %v299, %v298
    %v302 = vld [vmem:[%s5] sm:$0xf]
    %v303 = vld [vmem:[%s5 + $0x4] sm:$0xf]
    %v304 = vld [vmem:[%s5 + $0x8] sm:$0xf]
    %v305 = vld [vmem:[%s5 + $0xc] sm:$0xf]
    %v306 = vld [vmem:[%s5 + $0x10] sm:$0xf]
    %v307 = vld [vmem:[%s5 + $0x14] sm:$0xf]
    %v308 = vld [vmem:[%s5 + $0x18] sm:$0xf]
    %v309 = vld [vmem:[%s5 + $0x1c] sm:$0xf]
    %v310 = vld [vmem:[%s5 + $0x20] sm:$0xf]
    %v311 = vld [vmem:[%s5 + $0x24] sm:$0xf]
    %v312 = vld [vmem:[%s5 + $0x28] sm:$0xf]
    %v313 = vld [vmem:[%s5 + $0x2c] sm:$0xf]
    %v314 = vld [vmem:[%s5 + $0x30] sm:$0xf]
    %v315 = vld [vmem:[%s5 + $0x34] sm:$0xf]
    %v316 = vld [vmem:[%s5 + $0x38] sm:$0xf]
    %v317 = vld [vmem:[%s5 + $0x3c] sm:$0xf]
    %v318 = vld [vmem:[%s6] sm:$0x1]
    %v320 = vlaneseq
    %v321 = vshrl.u32 %v320, 7
    %v322 = vsub.s32 0, %v321
    %v323 = vrot.slane %v318, %v322
    %v341 = vunpack.c.l.b16 %v302
    %v342 = vunpack.c.l.b16 %v303
    %v343 = vunpack.c.l.b16 %v304
    %v344 = vunpack.c.l.b16 %v305
    %v345 = vunpack.c.l.b16 %v306
    %v346 = vunpack.c.l.b16 %v307
    %v347 = vunpack.c.l.b16 %v308
    %v348 = vunpack.c.l.b16 %v309
    %v349 = vunpack.c.l.b16 %v310
    %v350 = vunpack.c.l.b16 %v311
    %v351 = vunpack.c.l.b16 %v312
    %v352 = vunpack.c.l.b16 %v313
    %v353 = vunpack.c.l.b16 %v314
    %v354 = vunpack.c.l.b16 %v315
    %v355 = vunpack.c.l.b16 %v316
    %v356 = vunpack.c.l.b16 %v317
    %v357 = vpack.c.b16 %v342, %v341
    %v358 = vpack.c.b16 %v344, %v343
    %v359 = vpack.c.b16 %v346, %v345
    %v360 = vpack.c.b16 %v348, %v347
    %v361 = vpack.c.b16 %v350, %v349
    %v362 = vpack.c.b16 %v352, %v351
    %v363 = vpack.c.b16 %v354, %v353
    %v364 = vpack.c.b16 %v356, %v355
    %373 = vmatprep.subr.bf16.mxu0 0
    %374 = vmatpush1.bf16.msra.mxu0 %v357
    %375 = vmatprep.subr.bf16.mxu0 0
    %376 = vmatpush1.bf16.msra.mxu0 %v358
    %377 = vmatprep.subr.bf16.mxu0 0
    %378 = vmatpush1.bf16.msra.mxu0 %v359
    %379 = vmatprep.subr.bf16.mxu0 0
    %380 = vmatpush1.bf16.msra.mxu0 %v360
    %381 = vmatprep.subr.bf16.mxu0 0
    %382 = vmatpush1.bf16.msra.mxu0 %v361
    %383 = vmatprep.subr.bf16.mxu0 0
    %384 = vmatpush1.bf16.msra.mxu0 %v362
    %385 = vmatprep.subr.bf16.mxu0 0
    %386 = vmatpush1.bf16.msra.mxu0 %v363
    %387 = vmatprep.subr.bf16.mxu0 0
    %388 = vmatpush1.bf16.msra.mxu0 %v364
    %389 = vmatprep.subr.bf16.mxu0 0
    %390 = vmatpush1.bf16.msra.mxu0 0
    %391 = vmatprep.subr.bf16.mxu0 0
    %392 = vmatpush1.bf16.msra.mxu0 0
    %393 = vmatprep.subr.bf16.mxu0 0
    %394 = vmatpush1.bf16.msra.mxu0 0
    %395 = vmatprep.subr.bf16.mxu0 0
    %396 = vmatpush1.bf16.msra.mxu0 0
    %397 = vmatprep.subr.bf16.mxu0 0
    %398 = vmatpush1.bf16.msra.mxu0 0
    %399 = vmatprep.subr.bf16.mxu0 0
    %400 = vmatpush1.bf16.msra.mxu0 0
    %401 = vmatprep.subr.bf16.mxu0 0
    %402 = vmatpush1.bf16.msra.mxu0 0
    %403 = vmatprep.subr.bf16.mxu0 0
    %404 = vmatpush1.bf16.msra.mxu0 0
    %405 = vmatprep.mubr.bf16.mxu0 0
    %406 = vmatmul.mubr.bf16.gmra.mrb[0].mxu0 %v300
    %v407 = vpop.f32.mrb[0].mxu0
    %v408 = vadd.f32 %v323, %v407
    %v409 = vpop.f32.mrb[0].mxu0
    %v410 = vpop.f32.mrb[0].mxu0
    %v411 = vadd.f32 %v323, %v410
    %v412 = vpop.f32.mrb[0].mxu0
    %413 = vmatprep.mubr.bf16.mxu0 0
    %414 = vmatmul.mubr.bf16.gmra.mrb[0].mxu0 %v301
    %v415 = vpop.f32.mrb[0].mxu0
    %v416 = vadd.f32 %v323, %v415
    %v417 = vpop.f32.mrb[0].mxu0
    %v418 = vpop.f32.mrb[0].mxu0
    %v419 = vadd.f32 %v323, %v418
    %v420 = vpop.f32.mrb[0].mxu0
    %421 = vdwg.mxu0
    %422 = vst [vmem:[%s7] sm:$0xff] %v408
    %423 = vst [vmem:[%s7 + $0x8] sm:$0xff] %v411
    %424 = vst [vmem:[%s7 + $0x10] sm:$0xff] %v416
    %425 = vst [vmem:[%s7 + $0x18] sm:$0xff] %v419
  $region37: #{hon_augmentor_forward.4} parent=0 // pred_fallthru
    _
  // Predicated region
  $region38: #{hon_augmentor_forward.4} parent=0 // pred_check
    _
  $region39: #{hon_augmentor_forward.4} parent=0 // pred_check_branch
    %427 = sbr.rel (0) target = $region41
  $region40: #{hon_augmentor_forward.4} parent=0 // pred_region
    _
  $region41: #{hon_augmentor_forward.4} parent=0 // pred_fallthru
    _
  // Predicated region
  $region42: #{hon_augmentor_forward.4} parent=0 // pred_check
    _
  $region43: #{hon_augmentor_forward.4} parent=0 // pred_check_branch
    %429 = sbr.rel (0) target = $region45
  $region44: #{hon_augmentor_forward.4} parent=0 // pred_region
    _
  $region45: #{hon_augmentor_forward.4} parent=0 // pred_fallthru
    _

// kernel: hon_augmentor_forward.3
$region0: #{hon_augmentor_forward.3}
  #allocation0 [shape = 'u32[]', space=smem, size = 0x4, offset = 0x4, fixed_abs, tag = 'smem constant byte address 0x4 - core index']
  #allocation1 [shape = 'u32[144,128]{1,0:T(1,128)}', space=vmem, size = 0x12000, scoped, tag = 'internal scratch']
  #allocation2 [shape = 'f32[32,128]{1,0:T(8,128)}', space=vmem, size = 0x4000, scoped, tag = 'scratch operand']
  #allocation3 [shape = 'f32[1]{0:T(128)S(6)}', space=smem, size = 0x200, scoped, tag = 'scoped memory for hon_augmentor_forward.3']
  %s0 = inlined_call_operand.<no memory space> [shape: f32[1], index: 0, kind: input, shape index: {}]
  %s1 = inlined_call_operand.vmem [shape: s8[32,32], index: 1, kind: input, shape index: {}]
  %s2 = inlined_call_operand.vmem [shape: bf16[32,128], index: 2, kind: input, shape index: {}]
  %s3 = inlined_call_operand.vmem [shape: bf16[128,128], index: 3, kind: input, shape index: {}]
  %s4 = inlined_call_operand.vmem [shape: f32[1,128], index: 4, kind: input, shape index: {}]
  %s5 = inlined_call_operand.vmem [shape: bf16[128,128], index: 5, kind: input, shape index: {}]
  %s6 = inlined_call_operand.vmem [shape: f32[1,128], index: 6, kind: input, shape index: {}]
  %s7 = inlined_call_operand.vmem [shape: f32[32,128], index: 7, kind: output, shape index: {}]
  %s8 = sld [smem:[#allocation0]]
  $region46: #{hon_augmentor_forward.3} parent=0
    _
  %s10 = ssub.s32 1, %s8
  %s11 = scalar_select 0, %s10, %s8
  %12 = sst [smem:[#allocation3]] %s0
  // Predicated region
  $region2: #{hon_augmentor_forward.3} parent=0 // pred_check
    _
  $region3: #{hon_augmentor_forward.3} parent=0 // pred_check_branch
    %14 = sbr.rel (0) target = $region5
  $region4: #{hon_augmentor_forward.3} parent=0 // pred_region
    _
  $region5: #{hon_augmentor_forward.3} parent=0 // pred_fallthru
    _
  // Predicated region
  $region6: #{hon_augmentor_forward.3} parent=0 // pred_check
    _
  $region7: #{hon_augmentor_forward.3} parent=0 // pred_check_branch
    %16 = sbr.rel (0) target = $region9
  $region8: #{hon_augmentor_forward.3} parent=0 // pred_region
    _
  $region9: #{hon_augmentor_forward.3} parent=0 // pred_fallthru
    _
  // Predicated region
  $region10: #{hon_augmentor_forward.3} parent=0 // pred_check
    _
  $region11: #{hon_augmentor_forward.3} parent=0 // pred_check_branch
    %18 = sbr.rel (0) target = $region13
  $region12: #{hon_augmentor_forward.3} parent=0 // pred_region
    _
  $region13: #{hon_augmentor_forward.3} parent=0 // pred_fallthru
    _
  // Predicated region
  $region14: #{hon_augmentor_forward.3} parent=0 // pred_check
    _
  $region15: #{hon_augmentor_forward.3} parent=0 // pred_check_branch
    %20 = sbr.rel (0) target = $region17
  $region16: #{hon_augmentor_forward.3} parent=0 // pred_region
    _
  $region17: #{hon_augmentor_forward.3} parent=0 // pred_fallthru
    _
  // Predicated region
  $region18: #{hon_augmentor_forward.3} parent=0 // pred_check
    _
  $region19: #{hon_augmentor_forward.3} parent=0 // pred_check_branch
    %22 = sbr.rel (0) target = $region21
  $region20: #{hon_augmentor_forward.3} parent=0 // pred_region
    _
  $region21: #{hon_augmentor_forward.3} parent=0 // pred_fallthru
    _
  // Predicated region
  $region22: #{hon_augmentor_forward.3} parent=0 // pred_check
    _
  $region23: #{hon_augmentor_forward.3} parent=0 // pred_check_branch
    %24 = sbr.rel (0) target = $region25
  $region24: #{hon_augmentor_forward.3} parent=0 // pred_region
    _
  $region25: #{hon_augmentor_forward.3} parent=0 // pred_fallthru
    _
  // Predicated region
  $region26: #{hon_augmentor_forward.3} parent=0 // pred_check
    _
  $region27: #{hon_augmentor_forward.3} parent=0 // pred_check_branch
    %26 = sbr.rel (0) target = $region29
  $region28: #{hon_augmentor_forward.3} parent=0 // pred_region
    _
  $region29: #{hon_augmentor_forward.3} parent=0 // pred_fallthru
    _
  %p28 = scmp.eq.s32.totalorder 0, 0
  // Predicated region
  $region30: #{hon_augmentor_forward.3} parent=0 // pred_check
    %p29 = pneg %p28
  $region31: #{hon_augmentor_forward.3} parent=0 // pred_check_branch
    %31 = sbr.rel (%p29) target = $region33
  $region32: #{hon_augmentor_forward.3} parent=0 // pred_region
    %32 = vst [vmem:[#allocation2] sm:$0xff] 0.0
    %33 = vst [vmem:[#allocation2 + $0x8] sm:$0xff] 0.0
    %34 = vst [vmem:[#allocation2 + $0x10] sm:$0xff] 0.0
    %35 = vst [vmem:[#allocation2 + $0x18] sm:$0xff] 0.0
  $region33: #{hon_augmentor_forward.3} parent=0 // pred_fallthru
    _
  %s36 = smul.u32 0, 32
  %v37 = vld [vmem:[%s1] sm:$0x3]
  %v38 = vld [vmem:[%s1 + $0x2] sm:$0x3]
  %v39 = vld [vmem:[%s1 + $0x4] sm:$0x3]
  %v40 = vld [vmem:[%s1 + $0x6] sm:$0x3]
  %v41 = vunpack.c.l.s8.bf16 %v37
  %v42 = vunpack.c.l.s8.bf16 %v38
  %v43 = vunpack.c.l.s8.bf16 %v39
  %v44 = vunpack.c.l.s8.bf16 %v40
  %v45 = vld [vmem:[#allocation2] sm:$0xff]
  %v46 = vld [vmem:[#allocation2 + $0x8] sm:$0xff]
  %v47 = vld [vmem:[#allocation2 + $0x10] sm:$0xff]
  %v48 = vld [vmem:[#allocation2 + $0x18] sm:$0xff]
  %s49 = sshra.s32 %s36, 3
  %s50 = sand.u32 %s36, 7
  %s51 = smul.addr %s49, 4
  %s52 = scalar_lea.vmem %s2, %s51
  %v53 = vld [vmem:[%s52] sm:$0xf]
  %v54 = vld [vmem:[%s52 + $0x4] sm:$0xf]
  %v55 = vld [vmem:[%s52 + $0x8] sm:$0xf]
  %v56 = vld [vmem:[%s52 + $0xc] sm:$0xf]
  %v61 = vunpack.c.l.b16 %v41
  %v62 = vunpack.c.l.b16 %v42
  %v63 = vunpack.c.l.b16 %v43
  %v64 = vunpack.c.l.b16 %v44
  %v65 = vpack.c.b16 %v62, %v61
  %v66 = vpack.c.b16 %v64, %v63
  %v71 = vunpack.c.l.b16 %v53
  %v72 = vunpack.c.l.b16 %v54
  %v73 = vunpack.c.l.b16 %v55
  %v74 = vunpack.c.l.b16 %v56
  %v75 = vpack.c.b16 %v72, %v71
  %v76 = vpack.c.b16 %v74, %v73
  %vm79 = vcmask 261120
  %v81 = vsel %vm79, %v65, 0
  %v84 = vsel %vm79, %v66, 0
  %86 = vmatprep.subr.bf16.mxu0 0
  %87 = vmatpush1.bf16.msra.mxu0 %v75
  %88 = vmatprep.subr.bf16.mxu0 0
  %89 = vmatpush1.bf16.msra.mxu0 %v76
  %90 = vmatprep.subr.bf16.mxu0 0
  %91 = vmatpush1.bf16.msra.mxu0 0
  %92 = vmatprep.subr.bf16.mxu0 0
  %93 = vmatpush1.bf16.msra.mxu0 0
  %94 = vmatprep.subr.bf16.mxu0 0
  %95 = vmatpush1.bf16.msra.mxu0 0
  %96 = vmatprep.subr.bf16.mxu0 0
  %97 = vmatpush1.bf16.msra.mxu0 0
  %98 = vmatprep.subr.bf16.mxu0 0
  %99 = vmatpush1.bf16.msra.mxu0 0
  %100 = vmatprep.subr.bf16.mxu0 0
  %101 = vmatpush1.bf16.msra.mxu0 0
  %102 = vmatprep.subr.bf16.mxu0 0
  %103 = vmatpush1.bf16.msra.mxu0 0
  %104 = vmatprep.subr.bf16.mxu0 0
  %105 = vmatpush1.bf16.msra.mxu0 0
  %106 = vmatprep.subr.bf16.mxu0 0
  %107 = vmatpush1.bf16.msra.mxu0 0
  %108 = vmatprep.subr.bf16.mxu0 0
  %109 = vmatpush1.bf16.msra.mxu0 0
  %110 = vmatprep.subr.bf16.mxu0 0
  %111 = vmatpush1.bf16.msra.mxu0 0
  %112 = vmatprep.subr.bf16.mxu0 0
  %113 = vmatpush1.bf16.msra.mxu0 0
  %114 = vmatprep.subr.bf16.mxu0 0
  %115 = vmatpush1.bf16.msra.mxu0 0
  %116 = vmatprep.subr.bf16.mxu0 0
  %117 = vmatpush1.bf16.msra.mxu0 0
  %118 = vmatprep.mubr.bf16.mxu0 0
  %119 = vmatmul.mubr.bf16.gmra.mrb[0].mxu0 %v81
  %v120 = vpop.f32.mrb[0].mxu0
  %v121 = vadd.f32 0.0, %v120
  %v122 = vpop.f32.mrb[0].mxu0
  %v123 = vpop.f32.mrb[0].mxu0
  %v124 = vadd.f32 0.0, %v123
  %v125 = vpop.f32.mrb[0].mxu0
  %126 = vmatprep.mubr.bf16.mxu0 0
  %127 = vmatmul.mubr.bf16.gmra.mrb[0].mxu0 %v84
  %v128 = vpop.f32.mrb[0].mxu0
  %v129 = vadd.f32 0.0, %v128
  %v130 = vpop.f32.mrb[0].mxu0
  %v131 = vpop.f32.mrb[0].mxu0
  %v132 = vadd.f32 0.0, %v131
  %v133 = vpop.f32.mrb[0].mxu0
  %134 = vdwg.mxu0
  %v135 = vadd.f32 %v45, %v121
  %v136 = vadd.f32 %v46, %v124
  %v137 = vadd.f32 %v47, %v129
  %v138 = vadd.f32 %v48, %v132
  %139 = vst [vmem:[#allocation2] sm:$0xff] %v135
  %140 = vst [vmem:[#allocation2 + $0x8] sm:$0xff] %v136
  %141 = vst [vmem:[#allocation2 + $0x10] sm:$0xff] %v137
  %142 = vst [vmem:[#allocation2 + $0x18] sm:$0xff] %v138
  // Predicated region
  $region34: #{hon_augmentor_forward.3} parent=0 // pred_check
    %p143 = pneg %p28
  $region35: #{hon_augmentor_forward.3} parent=0 // pred_check_branch
    %145 = sbr.rel (%p143) target = $region37
  $region36: #{hon_augmentor_forward.3} parent=0 // pred_region
    %s146 = smul.u32 0, 32
    %s147 = sshra.s32 %s146, 3
    %s148 = sand.u32 %s146, 7
    %s149 = smul.addr %s147, 4
    %s150 = scalar_lea.vmem %s2, %s149
    %v151 = vld [vmem:[%s150] sm:$0xf]
    %v152 = vld [vmem:[%s150 + $0x4] sm:$0xf]
    %v153 = vld [vmem:[%s150 + $0x8] sm:$0xf]
    %v154 = vld [vmem:[%s150 + $0xc] sm:$0xf]
    %v155 = vunpack.c.l.bf16 %v151
    %v156 = vunpack.c.l.bf16 %v152
    %v157 = vunpack.c.l.bf16 %v153
    %v158 = vunpack.c.l.bf16 %v154
    %v159 = vld [vmem:[#allocation2] sm:$0xff]
    %v160 = vld [vmem:[#allocation2 + $0x8] sm:$0xff]
    %v161 = vld [vmem:[#allocation2 + $0x10] sm:$0xff]
    %v162 = vld [vmem:[#allocation2 + $0x18] sm:$0xff]
    %s163 = sld [smem:[#allocation3]]
    %s164 = sadd.f32 %s163, 1.0
    %v165 = vstv %s164
    %v166 = vmul.f32 %v165, %v155
    %v167 = vmul.f32 %v165, %v156
    %v168 = vmul.f32 %v165, %v157
    %v169 = vmul.f32 %v165, %v158
    %v170 = vadd.f32 %v159, %v166
    %v171 = vadd.f32 %v160, %v167
    %v172 = vadd.f32 %v161, %v168
    %v173 = vadd.f32 %v162, %v169
    %v174 = vpack.c.bf16 %v171, %v170
    %v175 = vpack.c.bf16 %v173, %v172
    %v176 = vld [vmem:[%s3] sm:$0xf]
    %v177 = vld [vmem:[%s3 + $0x4] sm:$0xf]
    %v178 = vld [vmem:[%s3 + $0x8] sm:$0xf]
    %v179 = vld [vmem:[%s3 + $0xc] sm:$0xf]
    %v180 = vld [vmem:[%s3 + $0x10] sm:$0xf]
    %v181 = vld [vmem:[%s3 + $0x14] sm:$0xf]
    %v182 = vld [vmem:[%s3 + $0x18] sm:$0xf]
    %v183 = vld [vmem:[%s3 + $0x1c] sm:$0xf]
    %v184 = vld [vmem:[%s3 + $0x20] sm:$0xf]
    %v185 = vld [vmem:[%s3 + $0x24] sm:$0xf]
    %v186 = vld [vmem:[%s3 + $0x28] sm:$0xf]
    %v187 = vld [vmem:[%s3 + $0x2c] sm:$0xf]
    %v188 = vld [vmem:[%s3 + $0x30] sm:$0xf]
    %v189 = vld [vmem:[%s3 + $0x34] sm:$0xf]
    %v190 = vld [vmem:[%s3 + $0x38] sm:$0xf]
    %v191 = vld [vmem:[%s3 + $0x3c] sm:$0xf]
    %v192 = vld [vmem:[%s4] sm:$0x1]
    %v194 = vlaneseq
    %v195 = vshrl.u32 %v194, 7
    %v196 = vsub.s32 0, %v195
    %v197 = vrot.slane %v192, %v196
    %v215 = vunpack.c.l.b16 %v176
    %v216 = vunpack.c.l.b16 %v177
    %v217 = vunpack.c.l.b16 %v178
    %v218 = vunpack.c.l.b16 %v179
    %v219 = vunpack.c.l.b16 %v180
    %v220 = vunpack.c.l.b16 %v181
    %v221 = vunpack.c.l.b16 %v182
    %v222 = vunpack.c.l.b16 %v183
    %v223 = vunpack.c.l.b16 %v184
    %v224 = vunpack.c.l.b16 %v185
    %v225 = vunpack.c.l.b16 %v186
    %v226 = vunpack.c.l.b16 %v187
    %v227 = vunpack.c.l.b16 %v188
    %v228 = vunpack.c.l.b16 %v189
    %v229 = vunpack.c.l.b16 %v190
    %v230 = vunpack.c.l.b16 %v191
    %v231 = vpack.c.b16 %v216, %v215
    %v232 = vpack.c.b16 %v218, %v217
    %v233 = vpack.c.b16 %v220, %v219
    %v234 = vpack.c.b16 %v222, %v221
    %v235 = vpack.c.b16 %v224, %v223
    %v236 = vpack.c.b16 %v226, %v225
    %v237 = vpack.c.b16 %v228, %v227
    %v238 = vpack.c.b16 %v230, %v229
    %247 = vmatprep.subr.bf16.mxu0 0
    %248 = vmatpush1.bf16.msra.mxu0 %v231
    %249 = vmatprep.subr.bf16.mxu0 0
    %250 = vmatpush1.bf16.msra.mxu0 %v232
    %251 = vmatprep.subr.bf16.mxu0 0
    %252 = vmatpush1.bf16.msra.mxu0 %v233
    %253 = vmatprep.subr.bf16.mxu0 0
    %254 = vmatpush1.bf16.msra.mxu0 %v234
    %255 = vmatprep.subr.bf16.mxu0 0
    %256 = vmatpush1.bf16.msra.mxu0 %v235
    %257 = vmatprep.subr.bf16.mxu0 0
    %258 = vmatpush1.bf16.msra.mxu0 %v236
    %259 = vmatprep.subr.bf16.mxu0 0
    %260 = vmatpush1.bf16.msra.mxu0 %v237
    %261 = vmatprep.subr.bf16.mxu0 0
    %262 = vmatpush1.bf16.msra.mxu0 %v238
    %263 = vmatprep.subr.bf16.mxu0 0
    %264 = vmatpush1.bf16.msra.mxu0 0
    %265 = vmatprep.subr.bf16.mxu0 0
    %266 = vmatpush1.bf16.msra.mxu0 0
    %267 = vmatprep.subr.bf16.mxu0 0
    %268 = vmatpush1.bf16.msra.mxu0 0
    %269 = vmatprep.subr.bf16.mxu0 0
    %270 = vmatpush1.bf16.msra.mxu0 0
    %271 = vmatprep.subr.bf16.mxu0 0
    %272 = vmatpush1.bf16.msra.mxu0 0
    %273 = vmatprep.subr.bf16.mxu0 0
    %274 = vmatpush1.bf16.msra.mxu0 0
    %275 = vmatprep.subr.bf16.mxu0 0
    %276 = vmatpush1.bf16.msra.mxu0 0
    %277 = vmatprep.subr.bf16.mxu0 0
    %278 = vmatpush1.bf16.msra.mxu0 0
    %279 = vmatprep.mubr.bf16.mxu0 0
    %280 = vmatmul.mubr.bf16.gmra.mrb[0].mxu0 %v174
    %v281 = vpop.f32.mrb[0].mxu0
    %v282 = vadd.f32 %v197, %v281
    %v283 = vpop.f32.mrb[0].mxu0
    %v284 = vpop.f32.mrb[0].mxu0
    %v285 = vadd.f32 %v197, %v284
    %v286 = vpop.f32.mrb[0].mxu0
    %287 = vmatprep.mubr.bf16.mxu0 0
    %288 = vmatmul.mubr.bf16.gmra.mrb[0].mxu0 %v175
    %v289 = vpop.f32.mrb[0].mxu0
    %v290 = vadd.f32 %v197, %v289
    %v291 = vpop.f32.mrb[0].mxu0
    %v292 = vpop.f32.mrb[0].mxu0
    %v293 = vadd.f32 %v197, %v292
    %v294 = vpop.f32.mrb[0].mxu0
    %295 = vdwg.mxu0
    %v296 = vmax.f32 %v282, 0.0
    %v297 = vmax.f32 %v285, 0.0
    %v298 = vmax.f32 %v290, 0.0
    %v299 = vmax.f32 %v293, 0.0
    %v300 = vpack.c.bf16 %v297, %v296
    %v301 = vpack.c.bf16 %v299, %v298
    %v302 = vld [vmem:[%s5] sm:$0xf]
    %v303 = vld [vmem:[%s5 + $0x4] sm:$0xf]
    %v304 = vld [vmem:[%s5 + $0x8] sm:$0xf]
    %v305 = vld [vmem:[%s5 + $0xc] sm:$0xf]
    %v306 = vld [vmem:[%s5 + $0x10] sm:$0xf]
    %v307 = vld [vmem:[%s5 + $0x14] sm:$0xf]
    %v308 = vld [vmem:[%s5 + $0x18] sm:$0xf]
    %v309 = vld [vmem:[%s5 + $0x1c] sm:$0xf]
    %v310 = vld [vmem:[%s5 + $0x20] sm:$0xf]
    %v311 = vld [vmem:[%s5 + $0x24] sm:$0xf]
    %v312 = vld [vmem:[%s5 + $0x28] sm:$0xf]
    %v313 = vld [vmem:[%s5 + $0x2c] sm:$0xf]
    %v314 = vld [vmem:[%s5 + $0x30] sm:$0xf]
    %v315 = vld [vmem:[%s5 + $0x34] sm:$0xf]
    %v316 = vld [vmem:[%s5 + $0x38] sm:$0xf]
    %v317 = vld [vmem:[%s5 + $0x3c] sm:$0xf]
    %v318 = vld [vmem:[%s6] sm:$0x1]
    %v320 = vlaneseq
    %v321 = vshrl.u32 %v320, 7
    %v322 = vsub.s32 0, %v321
    %v323 = vrot.slane %v318, %v322
    %v341 = vunpack.c.l.b16 %v302
    %v342 = vunpack.c.l.b16 %v303
    %v343 = vunpack.c.l.b16 %v304
    %v344 = vunpack.c.l.b16 %v305
    %v345 = vunpack.c.l.b16 %v306
    %v346 = vunpack.c.l.b16 %v307
    %v347 = vunpack.c.l.b16 %v308
    %v348 = vunpack.c.l.b16 %v309
    %v349 = vunpack.c.l.b16 %v310
    %v350 = vunpack.c.l.b16 %v311
    %v351 = vunpack.c.l.b16 %v312
    %v352 = vunpack.c.l.b16 %v313
    %v353 = vunpack.c.l.b16 %v314
    %v354 = vunpack.c.l.b16 %v315
    %v355 = vunpack.c.l.b16 %v316
    %v356 = vunpack.c.l.b16 %v317
    %v357 = vpack.c.b16 %v342, %v341
    %v358 = vpack.c.b16 %v344, %v343
    %v359 = vpack.c.b16 %v346, %v345
    %v360 = vpack.c.b16 %v348, %v347
    %v361 = vpack.c.b16 %v350, %v349
    %v362 = vpack.c.b16 %v352, %v351
    %v363 = vpack.c.b16 %v354, %v353
    %v364 = vpack.c.b16 %v356, %v355
    %373 = vmatprep.subr.bf16.mxu0 0
    %374 = vmatpush1.bf16.msra.mxu0 %v357
    %375 = vmatprep.subr.bf16.mxu0 0
    %376 = vmatpush1.bf16.msra.mxu0 %v358
    %377 = vmatprep.subr.bf16.mxu0 0
    %378 = vmatpush1.bf16.msra.mxu0 %v359
    %379 = vmatprep.subr.bf16.mxu0 0
    %380 = vmatpush1.bf16.msra.mxu0 %v360
    %381 = vmatprep.subr.bf16.mxu0 0
    %382 = vmatpush1.bf16.msra.mxu0 %v361
    %383 = vmatprep.subr.bf16.mxu0 0
    %384 = vmatpush1.bf16.msra.mxu0 %v362
    %385 = vmatprep.subr.bf16.mxu0 0
    %386 = vmatpush1.bf16.msra.mxu0 %v363
    %387 = vmatprep.subr.bf16.mxu0 0
    %388 = vmatpush1.bf16.msra.mxu0 %v364
    %389 = vmatprep.subr.bf16.mxu0 0
    %390 = vmatpush1.bf16.msra.mxu0 0
    %391 = vmatprep.subr.bf16.mxu0 0
    %392 = vmatpush1.bf16.msra.mxu0 0
    %393 = vmatprep.subr.bf16.mxu0 0
    %394 = vmatpush1.bf16.msra.mxu0 0
    %395 = vmatprep.subr.bf16.mxu0 0
    %396 = vmatpush1.bf16.msra.mxu0 0
    %397 = vmatprep.subr.bf16.mxu0 0
    %398 = vmatpush1.bf16.msra.mxu0 0
    %399 = vmatprep.subr.bf16.mxu0 0
    %400 = vmatpush1.bf16.msra.mxu0 0
    %401 = vmatprep.subr.bf16.mxu0 0
    %402 = vmatpush1.bf16.msra.mxu0 0
    %403 = vmatprep.subr.bf16.mxu0 0
    %404 = vmatpush1.bf16.msra.mxu0 0
    %405 = vmatprep.mubr.bf16.mxu0 0
    %406 = vmatmul.mubr.bf16.gmra.mrb[0].mxu0 %v300
    %v407 = vpop.f32.mrb[0].mxu0
    %v408 = vadd.f32 %v323, %v407
    %v409 = vpop.f32.mrb[0].mxu0
    %v410 = vpop.f32.mrb[0].mxu0
    %v411 = vadd.f32 %v323, %v410
    %v412 = vpop.f32.mrb[0].mxu0
    %413 = vmatprep.mubr.bf16.mxu0 0
    %414 = vmatmul.mubr.bf16.gmra.mrb[0].mxu0 %v301
    %v415 = vpop.f32.mrb[0].mxu0
    %v416 = vadd.f32 %v323, %v415
    %v417 = vpop.f32.mrb[0].mxu0
    %v418 = vpop.f32.mrb[0].mxu0
    %v419 = vadd.f32 %v323, %v418
    %v420 = vpop.f32.mrb[0].mxu0
    %421 = vdwg.mxu0
    %v422 = vmax.f32 %v408, 0.0
    %v423 = vmax.f32 %v411, 0.0
    %v424 = vmax.f32 %v416, 0.0
    %v425 = vmax.f32 %v419, 0.0
    %426 = vst [vmem:[%s7] sm:$0xff] %v422
    %427 = vst [vmem:[%s7 + $0x8] sm:$0xff] %v423
    %428 = vst [vmem:[%s7 + $0x10] sm:$0xff] %v424
    %429 = vst [vmem:[%s7 + $0x18] sm:$0xff] %v425
  $region37: #{hon_augmentor_forward.3} parent=0 // pred_fallthru
    _
  // Predicated region
  $region38: #{hon_augmentor_forward.3} parent=0 // pred_check
    _
  $region39: #{hon_augmentor_forward.3} parent=0 // pred_check_branch
    %431 = sbr.rel (0) target = $region41
  $region40: #{hon_augmentor_forward.3} parent=0 // pred_region
    _
  $region41: #{hon_augmentor_forward.3} parent=0 // pred_fallthru
    _
  // Predicated region
  $region42: #{hon_augmentor_forward.3} parent=0 // pred_check
    _
  $region43: #{hon_augmentor_forward.3} parent=0 // pred_check_branch
    %433 = sbr.rel (0) target = $region45
  $region44: #{hon_augmentor_forward.3} parent=0 // pred_region
    _
  $region45: #{hon_augmentor_forward.3} parent=0 // pred_fallthru
    _

// kernel: div.5
$region0: #{div.5}
  #allocation2 [shape = 's32[1]{0}', space=sflag, size = 0x4, scoped, tag = 'scoped memory for div.5']
  %s0 = inlined_call_operand.vmem [shape: f32[48], index: 0, kind: input, shape index: {}]
  %s1 = inlined_call_operand.vmem [shape: f32[48], index: 1, kind: input, shape index: {}]
  %s2 = inlined_call_operand.hbm [shape: f32[48], index: 2, kind: output, shape index: {}]
  $region1: #{div.5} parent=0
    #allocation0 [shape = 'u8[512]{0}', space=vmem, size = 0x400, scoped, tag = 'operand span for operand 2']
    #allocation1 [shape = 's32[1]{0}', space=sflag, size = 0x4, scoped, tag = 'scoped memory for div.5']
    %3 = vsyncpa [#allocation1], 0
    %v4 = vld [vmem:[%s0] sm:$0x1]
    %v5 = vld [vmem:[%s1] sm:$0x1]
    %6 = xla_tuple %v4, %v5
    %7 = xla_tuple %6
    %v8 = vrcp.pop %v5
    %v9 = vmul.f32 %v4, %v8
    %10 = xla_tuple %v9
    %11 = vst [vmem:[#allocation0] sm:$0x1] %v9
    %s13 = ssub.s32 16, 16
    %14 = vsyncadd [#allocation1], %s13
    %s16 = sshll.u32 [#allocation0], 4
    %s17 = int_to_ptr.vmem [resolvable:$true] %s16
    %19 = dma.vmem_to_hbm [thread:$0]  %s17, 16, %s2, [#allocation1]
    %20 = dma.done [#allocation1], 16
    %21 = vsyncpa [#allocation1], 1

</llo_original>
